<compile_context>
chip_gen: v7x
topology: tpu7x:2x2x1
jax: 0.10.0
libtpu: 0.0.40
codegen_flags: <defaults>
</compile_context>

<pallas_src>
import jax
import jax.numpy as jnp
from jax import lax
from jax.experimental import pallas as pl
from jax.experimental.pallas import tpu as pltpu

GC_HIDDEN = 1024  # fixed by GCNnet.__init__: GraphConvolution(input_dim, 1024)


def gcn_kernel(x_ref, sup_ref, wgc_ref, w1t_ref, b1t_ref, w2t_ref, b2t_ref,
               w3_ref, b3_ref, out_ref):
    tb = out_ref.shape[0]          # batch elements handled in this grid step
    c = sup_ref.shape[0]           # num_channel
    k = wgc_ref.shape[1]           # GC feature width (1024)

    # --- GraphConvolution, same op order as torch: xw = x @ W; out = relu(S@xw)
    # Pass 1: shared W_gc, batch stacked on rows -> good MXU row fill.
    xw = jnp.dot(x_ref[...], wgc_ref[...],
                 preferred_element_type=jnp.float32)            # (tb*C, K) f32
    xw = xw.astype(jnp.bfloat16)

    # Relayout (tb*C, K) -> (C, tb*K): batch folded onto lanes so support and
    # the MLP weights are applied once, shared across the whole batch.
    xw_l = jnp.concatenate([xw[b * c:(b + 1) * c, :] for b in range(tb)],
                           axis=1)                              # (C, tb*K)

    # Pass 2: support matmul + relu (the GraphConvolution activation).
    h = jnp.dot(sup_ref[...], xw_l,
                preferred_element_type=jnp.float32)             # (C, tb*K)
    h = jnp.maximum(h, 0.0).astype(jnp.bfloat16)

    # --- permute(0,2,1) + MLP, 1024-feature axis kept lane-dense -------------
    # y1t = relu(W1^T @ h + b1^T), y2t = relu(W2^T @ y1t + b2^T)
    y1 = jnp.dot(w1t_ref[...], h,
                 preferred_element_type=jnp.float32) + b1t_ref[...]
    y1 = jnp.maximum(y1, 0.0).astype(jnp.bfloat16)              # (H, tb*K)
    y2 = jnp.dot(w2t_ref[...], y1,
                 preferred_element_type=jnp.float32) + b2t_ref[...]
    y2 = jnp.maximum(y2, 0.0)                                   # (H, tb*K) f32

    # --- torch.mean(x, dim=1): lane-axis reduction per batch element ---------
    means = jnp.concatenate(
        [jnp.mean(y2[:, b * k:(b + 1) * k], axis=-1, keepdims=True)
         for b in range(tb)], axis=1)                           # (H, tb)

    # --- fused classifier + softmax epilogue (no per-sample Python loop) -----
    # Contract the H (sublane) axis of `means` directly against W3 -> (tb, O_pad)
    logits = lax.dot_general(means, w3_ref[...], (((0,), (0,)), ((), ())),
                             preferred_element_type=jnp.float32) + b3_ref[...]
    z = logits - jnp.max(logits, axis=-1, keepdims=True)
    e = jnp.exp(z)
    probs = e / jnp.sum(e, axis=-1, keepdims=True)              # (tb, O_pad)
    out_ref[...] = probs.reshape(tb, 1, probs.shape[-1])        # one dense store


def _full(shape):
    nd = len(shape)
    return pl.BlockSpec(shape, lambda i, _nd=nd: (0,) * _nd)


def _pick_tb(B, C, H, K=GC_HIDDEN, vmem_budget_bytes=24 << 20):
    """Batch elements folded into one grid step (operands grow linearly in tb)."""
    # Rough per-batch-element activation footprint inside the kernel.
    per_b = 2 * C * K * 2 + H * K * 2 + H * K * 4   # xw+h bf16, y1 bf16, y2 f32
    cap = max(1, vmem_budget_bytes // max(per_b, 1))
    cap = min(cap, 64)
    if B >= 2:
        cap = min(cap, B // 2)   # keep grid >= 2 so both v7x TensorCores get work
    cap = max(1, min(cap, B))
    for d in range(cap, 0, -1):  # largest divisor of B within the cap
        if B % d == 0:
            return d
    return 1                     # safe fallback (never the whole batch)


def prepare_weights(support, params):
    """One-time (per parameter set) layout / dtype / padding prep for the kernel."""
    bf16, f32 = jnp.bfloat16, jnp.float32
    O = params["w3"].shape[1]
    o_pad = ((O + 127) // 128) * 128
    w3p = jnp.pad(params["w3"].astype(f32), ((0, 0), (0, o_pad - O)))
    # Padded classes get a huge negative bias so softmax assigns them ~0 prob.
    b3p = jnp.pad(params["b3"].astype(f32), ((0, 0), (0, o_pad - O)),
                  constant_values=-1e30)
    return {
        "sup": support.astype(bf16),          # (C, C)
        "wgc": params["wgc"].astype(bf16),    # (D_in, 1024)
        "w1t": params["w1"].T.astype(bf16),   # (H, C)
        "b1t": params["b1"].T.astype(f32),    # (H, 1)
        "w2t": params["w2"].T.astype(bf16),   # (H, H)
        "b2t": params["b2"].T.astype(f32),    # (H, 1)
        "w3p": w3p,                           # (H, o_pad)
        "b3p": b3p,                           # (1, o_pad)
        "num_classes": O,
        "o_pad": o_pad,
    }


def gcnnet_forward(x, prepped, *, tb=None):
    """x: (B, input_dim, num_channel) 'NCW'."""
    B, D_in, C = x.shape
    H = prepped["w1t"].shape[0]
    K = prepped["wgc"].shape[1]
    O = prepped["num_classes"]
    o_pad = prepped["o_pad"]
    if tb is None:
        tb = _pick_tb(B, C, H, K)
    assert B % tb == 0
    grid = (B // tb,)

    # (B, D_in, C) -> (B, C, D_in) -> rows (B*C, D_in), bf16.
    # TODO(synk): at production D_in / C, fold this transpose into the kernel
    # (block x as (tb, D_in, C)) to avoid the extra HBM round-trip, and add a
    # K grid axis over W_gc with an f32 VMEM accumulator (pl.when
    # init/finalize) instead of keeping the whole weight resident.
    x_flat = jnp.transpose(x, (0, 2, 1)).reshape(B * C, D_in).astype(jnp.bfloat16)

    out = pl.pallas_call(
        gcn_kernel,
        out_shape=jax.ShapeDtypeStruct((B, 1, o_pad), jnp.float32),
        grid=grid,
        in_specs=[
            pl.BlockSpec((tb * C, D_in), lambda i: (i, 0)),   # x (tb batch rows)
            _full((C, C)),          # support (shared across batch)
            _full((D_in, K)),       # W_gc
            _full((H, C)),          # W1^T
            _full((H, 1)),          # b1^T
            _full((H, H)),          # W2^T
            _full((H, 1)),          # b2^T
            _full((H, o_pad)),      # classifier W (lane-padded)
            _full((1, o_pad)),      # classifier b (lane-padded)
        ],
        out_specs=pl.BlockSpec((tb, 1, o_pad), lambda i: (i, 0, 0)),
        compiler_params=pltpu.CompilerParams(
            dimension_semantics=("parallel",),   # batch axis shards over TCs
            vmem_limit_bytes=32 * 1024 * 1024),
    )(x_flat, prepped["sup"], prepped["wgc"], prepped["w1t"], prepped["b1t"],
      prepped["w2t"], prepped["b2t"], prepped["w3p"], prepped["b3p"])
    return out.reshape(B, o_pad)[:, :O]


def gcnnet_reference(x, support, params):
    xp = jnp.transpose(x, (0, 2, 1)).astype(jnp.float32)
    xw = jnp.einsum("bcd,dk->bck", xp, params["wgc"])
    h = jax.nn.relu(jnp.einsum("ce,bek->bck", support.astype(jnp.float32), xw))
    hT = jnp.transpose(h, (0, 2, 1))                                 # (B, 1024, C)
    y1 = jax.nn.relu(hT @ params["w1"] + params["b1"])
    y2 = jax.nn.relu(y1 @ params["w2"] + params["b2"])
    m = jnp.mean(y2, axis=1)
    logits = m @ params["w3"] + params["b3"]
    return jax.nn.softmax(logits, axis=1)


def init_params(key, input_dim, hidden_dim, output_dim, num_channel):
    ks = jax.random.split(key, 8)
    return {
        # GraphConvolution.weight = torch.randn(input_dim, 1024)
        "wgc": jax.random.normal(ks[0], (input_dim, GC_HIDDEN), jnp.float32),
        "w1": 0.1 * jax.random.normal(ks[1], (num_channel, hidden_dim), jnp.float32),
        "b1": 0.1 * jax.random.normal(ks[2], (1, hidden_dim), jnp.float32),
        "w2": 0.1 * jax.random.normal(ks[3], (hidden_dim, hidden_dim), jnp.float32),
        "b2": 0.1 * jax.random.normal(ks[4], (1, hidden_dim), jnp.float32),
        "w3": 0.1 * jax.random.normal(ks[5], (hidden_dim, output_dim), jnp.float32),
        "b3": 0.1 * jax.random.normal(ks[6], (1, output_dim), jnp.float32),
    }


if __name__ == "__main__":
    B, input_dim, hidden_dim, output_dim, num_channel = 2, 16, 32, 4, 8

    key = jax.random.PRNGKey(0)
    k_x, k_s, k_p = jax.random.split(key, 3)
    x = jax.random.normal(k_x, (B, input_dim, num_channel), jnp.float32)
    support = 0.5 * jax.random.normal(k_s, (num_channel, num_channel), jnp.float32)
    params = init_params(k_p, input_dim, hidden_dim, output_dim, num_channel)

    prepped = prepare_weights(support, params)   # once per parameter set
    out = gcnnet_forward(x, prepped)
    out = jax.block_until_ready(out)

    ref = gcnnet_reference(x, support, params)
    assert out.shape == (B, output_dim)
    assert jnp.allclose(jnp.sum(out, axis=1), 1.0, atol=1e-4)
    assert jnp.allclose(out, ref, atol=1e-2, rtol=1e-2)

    print("KERNEL_OK")
</pallas_src>

<mosaic_0001>
module attributes {stable_mosaic.version = 11 : i64} {
  func.func @gcn_kernel(%arg0: i32, %arg1: memref<8x16xbf16, #tpu.memory_space<vmem>>, %arg2: memref<8x8xbf16, #tpu.memory_space<vmem>>, %arg3: memref<16x1024xbf16, #tpu.memory_space<vmem>>, %arg4: memref<32x8xbf16, #tpu.memory_space<vmem>>, %arg5: memref<32x1xf32, #tpu.memory_space<vmem>>, %arg6: memref<32x32xbf16, #tpu.memory_space<vmem>>, %arg7: memref<32x1xf32, #tpu.memory_space<vmem>>, %arg8: memref<32x128xf32, #tpu.memory_space<vmem>>, %arg9: memref<1x128xf32, #tpu.memory_space<vmem>>, %arg10: memref<1x1x128xf32, #tpu.memory_space<vmem>>) attributes {dimension_semantics = [#tpu.dimension_semantics<parallel>], iteration_bounds = array<i64: 2>, scalar_prefetch = 0 : i64, scratch_operands = 0 : i64, tpu.core_type = #tpu.core_type<tc>, window_params = [{transform_indices = @transform_0, window_bounds = array<i64: 8, 16>}, {pipeline_mode = #tpu.pipeline_mode<synchronous>, transform_indices = @transform_1, window_bounds = array<i64: 8, 8>}, {pipeline_mode = #tpu.pipeline_mode<synchronous>, transform_indices = @transform_2, window_bounds = array<i64: 16, 1024>}, {pipeline_mode = #tpu.pipeline_mode<synchronous>, transform_indices = @transform_3, window_bounds = array<i64: 32, 8>}, {pipeline_mode = #tpu.pipeline_mode<synchronous>, transform_indices = @transform_4, window_bounds = array<i64: 32, 1>}, {pipeline_mode = #tpu.pipeline_mode<synchronous>, transform_indices = @transform_5, window_bounds = array<i64: 32, 32>}, {pipeline_mode = #tpu.pipeline_mode<synchronous>, transform_indices = @transform_6, window_bounds = array<i64: 32, 1>}, {pipeline_mode = #tpu.pipeline_mode<synchronous>, transform_indices = @transform_7, window_bounds = array<i64: 32, 128>}, {pipeline_mode = #tpu.pipeline_mode<synchronous>, transform_indices = @transform_8, window_bounds = array<i64: 1, 128>}, {transform_indices = @transform_9, window_bounds = array<i64: 1, 1, 128>}]} {
    %c0 = arith.constant 0 : index
    %c0_0 = arith.constant 0 : index
    %0 = vector.load %arg1[%c0, %c0_0] : memref<8x16xbf16, #tpu.memory_space<vmem>>, vector<8x16xbf16>
    %c0_1 = arith.constant 0 : index
    %c0_2 = arith.constant 0 : index
    %1 = vector.load %arg3[%c0_1, %c0_2] : memref<16x1024xbf16, #tpu.memory_space<vmem>>, vector<16x1024xbf16>
    %cst = arith.constant dense<0.000000e+00> : vector<8x1024xf32>
    %2 = tpu.matmul %0, %1, %cst {dimension_numbers = #tpu.dot_dimension_numbers<[1], [0], [0], [1], [0, 0, 1, 1], [], []>} : vector<8x16xbf16>, vector<16x1024xbf16>, vector<8x1024xf32> -> vector<8x1024xf32>
    %3 = arith.truncf %2 : vector<8x1024xf32> to vector<8x1024xbf16>
    %c0_3 = arith.constant 0 : index
    %c0_4 = arith.constant 0 : index
    %4 = vector.load %arg2[%c0_3, %c0_4] : memref<8x8xbf16, #tpu.memory_space<vmem>>, vector<8x8xbf16>
    %cst_5 = arith.constant dense<0.000000e+00> : vector<8x1024xf32>
    %5 = tpu.matmul %4, %3, %cst_5 {dimension_numbers = #tpu.dot_dimension_numbers<[1], [0], [0], [1], [0, 0, 1, 1], [], []>} : vector<8x8xbf16>, vector<8x1024xbf16>, vector<8x1024xf32> -> vector<8x1024xf32>
    %cst_6 = arith.constant 0.000000e+00 : f32
    %6 = vector.broadcast %cst_6 : f32 to vector<8x1024xf32>
    %7 = arith.maximumf %5, %6 : vector<8x1024xf32>
    %8 = arith.truncf %7 : vector<8x1024xf32> to vector<8x1024xbf16>
    %c0_7 = arith.constant 0 : index
    %c0_8 = arith.constant 0 : index
    %9 = vector.load %arg4[%c0_7, %c0_8] : memref<32x8xbf16, #tpu.memory_space<vmem>>, vector<32x8xbf16>
    %cst_9 = arith.constant dense<0.000000e+00> : vector<32x1024xf32>
    %10 = tpu.matmul %9, %8, %cst_9 {dimension_numbers = #tpu.dot_dimension_numbers<[1], [0], [0], [1], [0, 0, 1, 1], [], []>} : vector<32x8xbf16>, vector<8x1024xbf16>, vector<32x1024xf32> -> vector<32x1024xf32>
    %c0_10 = arith.constant 0 : index
    %c0_11 = arith.constant 0 : index
    %11 = vector.load %arg5[%c0_10, %c0_11] : memref<32x1xf32, #tpu.memory_space<vmem>>, vector<32x1xf32>
    %12 = vector.broadcast %11 : vector<32x1xf32> to vector<32x1024xf32>
    %13 = arith.addf %10, %12 : vector<32x1024xf32>
    %cst_12 = arith.constant 0.000000e+00 : f32
    %14 = vector.broadcast %cst_12 : f32 to vector<32x1024xf32>
    %15 = arith.maximumf %13, %14 : vector<32x1024xf32>
    %16 = arith.truncf %15 : vector<32x1024xf32> to vector<32x1024xbf16>
    %c0_13 = arith.constant 0 : index
    %c0_14 = arith.constant 0 : index
    %17 = vector.load %arg6[%c0_13, %c0_14] : memref<32x32xbf16, #tpu.memory_space<vmem>>, vector<32x32xbf16>
    %cst_15 = arith.constant dense<0.000000e+00> : vector<32x1024xf32>
    %18 = tpu.matmul %17, %16, %cst_15 {dimension_numbers = #tpu.dot_dimension_numbers<[1], [0], [0], [1], [0, 0, 1, 1], [], []>} : vector<32x32xbf16>, vector<32x1024xbf16>, vector<32x1024xf32> -> vector<32x1024xf32>
    %c0_16 = arith.constant 0 : index
    %c0_17 = arith.constant 0 : index
    %19 = vector.load %arg7[%c0_16, %c0_17] : memref<32x1xf32, #tpu.memory_space<vmem>>, vector<32x1xf32>
    %20 = vector.broadcast %19 : vector<32x1xf32> to vector<32x1024xf32>
    %21 = arith.addf %18, %20 : vector<32x1024xf32>
    %cst_18 = arith.constant 0.000000e+00 : f32
    %22 = vector.broadcast %cst_18 : f32 to vector<32x1024xf32>
    %23 = arith.maximumf %21, %22 : vector<32x1024xf32>
    %cst_19 = arith.constant dense<0.000000e+00> : vector<32xf32>
    %24 = vector.multi_reduction <add>, %23, %cst_19 [1] : vector<32x1024xf32> to vector<32xf32>
    %25 = vector.shape_cast %24 : vector<32xf32> to vector<32x1xf32>
    %cst_20 = arith.constant 1.024000e+03 : f32
    %26 = vector.broadcast %cst_20 : f32 to vector<32x1xf32>
    %27 = arith.divf %25, %26 : vector<32x1xf32>
    %c0_21 = arith.constant 0 : index
    %c0_22 = arith.constant 0 : index
    %28 = vector.load %arg8[%c0_21, %c0_22] : memref<32x128xf32, #tpu.memory_space<vmem>>, vector<32x128xf32>
    %cst_23 = arith.constant dense<0.000000e+00> : vector<1x128xf32>
    %29 = tpu.matmul %27, %28, %cst_23 {dimension_numbers = #tpu.dot_dimension_numbers<[0], [0], [1], [1], [0, 1, 1, 1], [], []>} : vector<32x1xf32>, vector<32x128xf32>, vector<1x128xf32> -> vector<1x128xf32>
    %c0_24 = arith.constant 0 : index
    %c0_25 = arith.constant 0 : index
    %30 = vector.load %arg9[%c0_24, %c0_25] : memref<1x128xf32, #tpu.memory_space<vmem>>, vector<1x128xf32>
    %31 = arith.addf %29, %30 : vector<1x128xf32>
    %cst_26 = arith.constant dense<0xFF800000> : vector<1xf32>
    %32 = vector.multi_reduction <maximumf>, %31, %cst_26 [1] : vector<1x128xf32> to vector<1xf32>
    %33 = vector.shape_cast %32 : vector<1xf32> to vector<1x1xf32>
    %34 = vector.broadcast %33 : vector<1x1xf32> to vector<1x128xf32>
    %35 = arith.subf %31, %34 : vector<1x128xf32>
    %36 = math.exp %35 : vector<1x128xf32>
    %cst_27 = arith.constant dense<0.000000e+00> : vector<1xf32>
    %37 = vector.multi_reduction <add>, %36, %cst_27 [1] : vector<1x128xf32> to vector<1xf32>
    %38 = vector.shape_cast %37 : vector<1xf32> to vector<1x1xf32>
    %39 = vector.broadcast %38 : vector<1x1xf32> to vector<1x128xf32>
    %40 = arith.divf %36, %39 : vector<1x128xf32>
    %41 = vector.shape_cast %40 : vector<1x128xf32> to vector<1x1x128xf32>
    %c0_28 = arith.constant 0 : index
    %c0_29 = arith.constant 0 : index
    %c0_30 = arith.constant 0 : index
    %42 = vector.load %arg10[%c0_28, %c0_29, %c0_30] : memref<1x1x128xf32, #tpu.memory_space<vmem>>, vector<1x1x128xf32>
    tpu.vector_store %arg10[%c0_28, %c0_29, %c0_30], %41 {strides = array<i32>} : memref<1x1x128xf32, #tpu.memory_space<vmem>>, vector<1x1x128xf32>,
    return
  }
  func.func @transform_0(%arg0: i32) -> (i32, i32) {
    %c0_i32 = arith.constant 0 : i32
    %c0_i32_0 = arith.constant 0 : i32
    return %arg0, %c0_i32 : i32, i32
  }
  func.func @transform_1(%arg0: i32) -> (i32, i32) {
    %c0_i32 = arith.constant 0 : i32
    %c0_i32_0 = arith.constant 0 : i32
    %c0_i32_1 = arith.constant 0 : i32
    return %c0_i32, %c0_i32_0 : i32, i32
  }
  func.func @transform_2(%arg0: i32) -> (i32, i32) {
    %c0_i32 = arith.constant 0 : i32
    %c0_i32_0 = arith.constant 0 : i32
    %c0_i32_1 = arith.constant 0 : i32
    return %c0_i32, %c0_i32_0 : i32, i32
  }
  func.func @transform_3(%arg0: i32) -> (i32, i32) {
    %c0_i32 = arith.constant 0 : i32
    %c0_i32_0 = arith.constant 0 : i32
    %c0_i32_1 = arith.constant 0 : i32
    return %c0_i32, %c0_i32_0 : i32, i32
  }
  func.func @transform_4(%arg0: i32) -> (i32, i32) {
    %c0_i32 = arith.constant 0 : i32
    %c0_i32_0 = arith.constant 0 : i32
    %c0_i32_1 = arith.constant 0 : i32
    return %c0_i32, %c0_i32_0 : i32, i32
  }
  func.func @transform_5(%arg0: i32) -> (i32, i32) {
    %c0_i32 = arith.constant 0 : i32
    %c0_i32_0 = arith.constant 0 : i32
    %c0_i32_1 = arith.constant 0 : i32
    return %c0_i32, %c0_i32_0 : i32, i32
  }
  func.func @transform_6(%arg0: i32) -> (i32, i32) {
    %c0_i32 = arith.constant 0 : i32
    %c0_i32_0 = arith.constant 0 : i32
    %c0_i32_1 = arith.constant 0 : i32
    return %c0_i32, %c0_i32_0 : i32, i32
  }
  func.func @transform_7(%arg0: i32) -> (i32, i32) {
    %c0_i32 = arith.constant 0 : i32
    %c0_i32_0 = arith.constant 0 : i32
    %c0_i32_1 = arith.constant 0 : i32
    return %c0_i32, %c0_i32_0 : i32, i32
  }
  func.func @transform_8(%arg0: i32) -> (i32, i32) {
    %c0_i32 = arith.constant 0 : i32
    %c0_i32_0 = arith.constant 0 : i32
    %c0_i32_1 = arith.constant 0 : i32
    return %c0_i32, %c0_i32_0 : i32, i32
  }
  func.func @transform_9(%arg0: i32) -> (i32, i32, i32) {
    %c0_i32 = arith.constant 0 : i32
    %c0_i32_0 = arith.constant 0 : i32
    %c0_i32_1 = arith.constant 0 : i32
    return %arg0, %c0_i32, %c0_i32_0 : i32, i32, i32
  }
}

</mosaic_0001>

<llo_original>
// kernel: tpu_custom_call.1
$region0: #{tpu_custom_call.1}
  #allocation0 [shape = 'u32[]', space=smem, size = 0x4, offset = 0x4, fixed_abs, tag = 'smem constant byte address 0x4 - core index']
  #allocation1 [shape = 'u32[144,128]{1,0:T(1,128)}', space=vmem, size = 0x12000, scoped, tag = 'internal scratch']
  %s0 = inlined_call_operand.hbm [shape: bf16[16,16], index: 0, kind: input, shape index: {}]
  %s1 = inlined_call_operand.hbm [shape: bf16[8,8], index: 1, kind: input, shape index: {}]
  %s2 = inlined_call_operand.vmem [shape: bf16[16,1024], index: 2, kind: input, shape index: {}]
  %s3 = inlined_call_operand.vmem [shape: bf16[32,8], index: 3, kind: input, shape index: {}]
  %s4 = inlined_call_operand.vmem [shape: f32[32,1], index: 4, kind: input, shape index: {}]
  %s5 = inlined_call_operand.hbm [shape: bf16[32,32], index: 5, kind: input, shape index: {}]
  %s6 = inlined_call_operand.vmem [shape: f32[32,1], index: 6, kind: input, shape index: {}]
  %s7 = inlined_call_operand.vmem [shape: f32[32,128], index: 7, kind: input, shape index: {}]
  %s8 = inlined_call_operand.vmem [shape: f32[1,128], index: 8, kind: input, shape index: {}]
  %s9 = inlined_call_operand.hbm [shape: f32[2,1,128], index: 9, kind: output, shape index: {}]
  %s10 = sld [smem:[#allocation0]]
  $region81: #{tpu_custom_call.1} parent=0
    _
  %s12 = ssub.s32 1, %s10
  %s13 = scalar_select 0, %s12, %s10
  $region1: #{tpu_custom_call.1} parent=0
    #allocation2 [shape = 'u8[4096]{0}', space=vmem, size = 0x1000, scoped, tag = 'input window, operand 0']
    #allocation3 [shape = 's32[2]{0}', space=sflag, size = 0x8, scoped, tag = 'scoped memory for tpu_custom_call.1']
    #allocation4 [shape = 's32[2]{0}', space=sflag, size = 0x8, scoped, tag = 'scoped memory for tpu_custom_call.1']
    #allocation5 [shape = 'u8[2048]{0}', space=vmem, size = 0x800, scoped, tag = 'input window, operand 1, single buffered']
    #allocation6 [shape = 's32[1]{0}', space=sflag, size = 0x4, scoped, tag = 'scoped memory for tpu_custom_call.1']
    #allocation7 [shape = 'u8[8192]{0}', space=vmem, size = 0x2000, scoped, tag = 'input window, operand 5, single buffered']
    #allocation8 [shape = 'u8[1024]{0}', space=vmem, size = 0x400, scoped, tag = 'output window, operand 0']
    %14 = vsyncpa [#allocation3], 0
    %s15 = scalar_lea.sflag [#allocation3], 1
    %16 = vsyncpa %s15, 0
    %17 = vsyncpa [#allocation6], 0
    %18 = vsyncpa [#allocation4], 0
    %s19 = scalar_lea.sflag [#allocation4], 1
    %20 = vsyncpa %s19, 0
    loop: start=0, step=1, limit=4
    $region2: #{tpu_custom_call.1} parent=1 // loop_pre_header
      _
    $region3: #{tpu_custom_call.1} parent=1 // loop_header
      %s22 = sphi 0, %s26
      %p23 = scmp.ge.s32.totalorder %s22, 4
      %s32 = sphi 0, %s34
      %s35 = sphi 0, %s32
      %s36 = sphi 0, %s35
      %s52 = sphi 0, %s36
      %s56 = sphi 0, %s56
      %s58 = sphi 0, %s56
      %s59 = sphi 0, %s58
      %s73 = sphi 0, %s59
      %s77 = sphi 0, %s77
      %s79 = sphi 0, %s77
      %s80 = sphi 0, %s79
      %s94 = sphi 0, %s80
      %s98 = sphi 0, %s98
      %s100 = sphi 0, %s98
      %s101 = sphi 0, %s100
      %s115 = sphi 0, %s101
      %s119 = sphi 0, %s119
      %s121 = sphi 0, %s119
      %s122 = sphi 0, %s121
      %s136 = sphi 0, %s122
      %s140 = sphi 0, %s140
      %s142 = sphi 0, %s140
      %s143 = sphi 0, %s142
      %s157 = sphi 0, %s143
      %s161 = sphi 0, %s161
      %s163 = sphi 0, %s161
      %s164 = sphi 0, %s163
      %s178 = sphi 0, %s164
      %s182 = sphi 0, %s182
      %s184 = sphi 0, %s182
      %s185 = sphi 0, %s184
      %s199 = sphi 0, %s185
      %s203 = sphi 0, %s203
      %s205 = sphi 0, %s203
      %s206 = sphi 0, %s205
      %s220 = sphi 0, %s206
      %s226 = sphi 0, %s228
      %s229 = sphi 0, %s226
      %s230 = sphi 0, %s229
      %s246 = sphi 0, %s230
    $region4: #{tpu_custom_call.1} parent=1 // loop_header_branch
      %25 = sbr.rel (%p23) target = $region8
    $region5: #{tpu_custom_call.1} parent=1 // loop_body
      %s27 = ssub.s32 %s22, 1
      %s28 = ssub.s32 %s22, 2
      %s29 = sadd.s32 %s22, 1
      %s30 = ssub.s32 %s22, %s29
      %p31 = scmp.eq.s32.totalorder %s30, 0
      %s33 = sadd.s32 %s32, 1
      %s34 = scalar_select %p31, %s32, %s33
      %p37 = pneg %p31
      %p38 = scmp.eq.s32.totalorder %s22, 1
      %p39 = por %p37, %p38
      %p40 = scmp.ne.s32.totalorder %s32, %s35
      %p41 = scmp.eq.s32.totalorder %s22, 0
      %p42 = por %p40, %p41
      %p43 = scmp.ne.s32.totalorder %s32, %s35
      %p44 = scmp.eq.s32.totalorder %s27, 1
      %p45 = por %p43, %p44
      %p46 = scmp.ne.s32.totalorder %s35, %s36
      %p47 = scmp.eq.s32.totalorder %s27, 0
      %p48 = por %p46, %p47
      %p49 = scmp.ne.s32.totalorder %s35, %s36
      %p50 = scmp.eq.s32.totalorder %s28, 1
      %p51 = por %p49, %p50
      %p53 = scmp.ne.s32.totalorder %s36, %s52
      %p54 = scmp.eq.s32.totalorder %s28, 0
      %p55 = por %p53, %p54
      %s57 = sadd.s32 %s56, 1
      %p60 = scmp.eq.s32.totalorder %s22, 1
      %p61 = scmp.ne.s32.totalorder %s56, %s58
      %p62 = scmp.eq.s32.totalorder %s22, 0
      %p63 = por %p61, %p62
      %p64 = scmp.ne.s32.totalorder %s56, %s58
      %p65 = scmp.eq.s32.totalorder %s27, 1
      %p66 = por %p64, %p65
      %p67 = scmp.ne.s32.totalorder %s58, %s59
      %p68 = scmp.eq.s32.totalorder %s27, 0
      %p69 = por %p67, %p68
      %p70 = scmp.ne.s32.totalorder %s58, %s59
      %p71 = scmp.eq.s32.totalorder %s28, 1
      %p72 = por %p70, %p71
      %p74 = scmp.ne.s32.totalorder %s59, %s73
      %p75 = scmp.eq.s32.totalorder %s28, 0
      %p76 = por %p74, %p75
      %s78 = sadd.s32 %s77, 1
      %p81 = scmp.eq.s32.totalorder %s22, 1
      %p82 = scmp.ne.s32.totalorder %s77, %s79
      %p83 = scmp.eq.s32.totalorder %s22, 0
      %p84 = por %p82, %p83
      %p85 = scmp.ne.s32.totalorder %s77, %s79
      %p86 = scmp.eq.s32.totalorder %s27, 1
      %p87 = por %p85, %p86
      %p88 = scmp.ne.s32.totalorder %s79, %s80
      %p89 = scmp.eq.s32.totalorder %s27, 0
      %p90 = por %p88, %p89
      %p91 = scmp.ne.s32.totalorder %s79, %s80
      %p92 = scmp.eq.s32.totalorder %s28, 1
      %p93 = por %p91, %p92
      %p95 = scmp.ne.s32.totalorder %s80, %s94
      %p96 = scmp.eq.s32.totalorder %s28, 0
      %p97 = por %p95, %p96
      %s99 = sadd.s32 %s98, 1
      %p102 = scmp.eq.s32.totalorder %s22, 1
      %p103 = scmp.ne.s32.totalorder %s98, %s100
      %p104 = scmp.eq.s32.totalorder %s22, 0
      %p105 = por %p103, %p104
      %p106 = scmp.ne.s32.totalorder %s98, %s100
      %p107 = scmp.eq.s32.totalorder %s27, 1
      %p108 = por %p106, %p107
      %p109 = scmp.ne.s32.totalorder %s100, %s101
      %p110 = scmp.eq.s32.totalorder %s27, 0
      %p111 = por %p109, %p110
      %p112 = scmp.ne.s32.totalorder %s100, %s101
      %p113 = scmp.eq.s32.totalorder %s28, 1
      %p114 = por %p112, %p113
      %p116 = scmp.ne.s32.totalorder %s101, %s115
      %p117 = scmp.eq.s32.totalorder %s28, 0
      %p118 = por %p116, %p117
      %s120 = sadd.s32 %s119, 1
      %p123 = scmp.eq.s32.totalorder %s22, 1
      %p124 = scmp.ne.s32.totalorder %s119, %s121
      %p125 = scmp.eq.s32.totalorder %s22, 0
      %p126 = por %p124, %p125
      %p127 = scmp.ne.s32.totalorder %s119, %s121
      %p128 = scmp.eq.s32.totalorder %s27, 1
      %p129 = por %p127, %p128
      %p130 = scmp.ne.s32.totalorder %s121, %s122
      %p131 = scmp.eq.s32.totalorder %s27, 0
      %p132 = por %p130, %p131
      %p133 = scmp.ne.s32.totalorder %s121, %s122
      %p134 = scmp.eq.s32.totalorder %s28, 1
      %p135 = por %p133, %p134
      %p137 = scmp.ne.s32.totalorder %s122, %s136
      %p138 = scmp.eq.s32.totalorder %s28, 0
      %p139 = por %p137, %p138
      %s141 = sadd.s32 %s140, 1
      %p144 = scmp.eq.s32.totalorder %s22, 1
      %p145 = scmp.ne.s32.totalorder %s140, %s142
      %p146 = scmp.eq.s32.totalorder %s22, 0
      %p147 = por %p145, %p146
      %p148 = scmp.ne.s32.totalorder %s140, %s142
      %p149 = scmp.eq.s32.totalorder %s27, 1
      %p150 = por %p148, %p149
      %p151 = scmp.ne.s32.totalorder %s142, %s143
      %p152 = scmp.eq.s32.totalorder %s27, 0
      %p153 = por %p151, %p152
      %p154 = scmp.ne.s32.totalorder %s142, %s143
      %p155 = scmp.eq.s32.totalorder %s28, 1
      %p156 = por %p154, %p155
      %p158 = scmp.ne.s32.totalorder %s143, %s157
      %p159 = scmp.eq.s32.totalorder %s28, 0
      %p160 = por %p158, %p159
      %s162 = sadd.s32 %s161, 1
      %p165 = scmp.eq.s32.totalorder %s22, 1
      %p166 = scmp.ne.s32.totalorder %s161, %s163
      %p167 = scmp.eq.s32.totalorder %s22, 0
      %p168 = por %p166, %p167
      %p169 = scmp.ne.s32.totalorder %s161, %s163
      %p170 = scmp.eq.s32.totalorder %s27, 1
      %p171 = por %p169, %p170
      %p172 = scmp.ne.s32.totalorder %s163, %s164
      %p173 = scmp.eq.s32.totalorder %s27, 0
      %p174 = por %p172, %p173
      %p175 = scmp.ne.s32.totalorder %s163, %s164
      %p176 = scmp.eq.s32.totalorder %s28, 1
      %p177 = por %p175, %p176
      %p179 = scmp.ne.s32.totalorder %s164, %s178
      %p180 = scmp.eq.s32.totalorder %s28, 0
      %p181 = por %p179, %p180
      %s183 = sadd.s32 %s182, 1
      %p186 = scmp.eq.s32.totalorder %s22, 1
      %p187 = scmp.ne.s32.totalorder %s182, %s184
      %p188 = scmp.eq.s32.totalorder %s22, 0
      %p189 = por %p187, %p188
      %p190 = scmp.ne.s32.totalorder %s182, %s184
      %p191 = scmp.eq.s32.totalorder %s27, 1
      %p192 = por %p190, %p191
      %p193 = scmp.ne.s32.totalorder %s184, %s185
      %p194 = scmp.eq.s32.totalorder %s27, 0
      %p195 = por %p193, %p194
      %p196 = scmp.ne.s32.totalorder %s184, %s185
      %p197 = scmp.eq.s32.totalorder %s28, 1
      %p198 = por %p196, %p197
      %p200 = scmp.ne.s32.totalorder %s185, %s199
      %p201 = scmp.eq.s32.totalorder %s28, 0
      %p202 = por %p200, %p201
      %s204 = sadd.s32 %s203, 1
      %p207 = scmp.eq.s32.totalorder %s22, 1
      %p208 = scmp.ne.s32.totalorder %s203, %s205
      %p209 = scmp.eq.s32.totalorder %s22, 0
      %p210 = por %p208, %p209
      %p211 = scmp.ne.s32.totalorder %s203, %s205
      %p212 = scmp.eq.s32.totalorder %s27, 1
      %p213 = por %p211, %p212
      %p214 = scmp.ne.s32.totalorder %s205, %s206
      %p215 = scmp.eq.s32.totalorder %s27, 0
      %p216 = por %p214, %p215
      %p217 = scmp.ne.s32.totalorder %s205, %s206
      %p218 = scmp.eq.s32.totalorder %s28, 1
      %p219 = por %p217, %p218
      %p221 = scmp.ne.s32.totalorder %s206, %s220
      %p222 = scmp.eq.s32.totalorder %s28, 0
      %p223 = por %p221, %p222
      %s224 = ssub.s32 %s22, %s29
      %p225 = scmp.eq.s32.totalorder %s224, 0
      %s227 = sadd.s32 %s226, 1
      %s228 = scalar_select %p225, %s226, %s227
      %p231 = pneg %p225
      %p232 = scmp.eq.s32.totalorder %s22, 1
      %p233 = por %p231, %p232
      %p234 = scmp.ne.s32.totalorder %s226, %s229
      %p235 = scmp.eq.s32.totalorder %s22, 0
      %p236 = por %p234, %p235
      %p237 = scmp.ne.s32.totalorder %s226, %s229
      %p238 = scmp.eq.s32.totalorder %s27, 1
      %p239 = por %p237, %p238
      %p240 = scmp.ne.s32.totalorder %s229, %s230
      %p241 = scmp.eq.s32.totalorder %s27, 0
      %p242 = por %p240, %p241
      %p243 = scmp.ne.s32.totalorder %s229, %s230
      %p244 = scmp.eq.s32.totalorder %s28, 1
      %p245 = por %p243, %p244
      %p247 = scmp.ne.s32.totalorder %s230, %s246
      %p248 = scmp.eq.s32.totalorder %s28, 0
      %p249 = por %p247, %p248
      %p250 = scmp.le.s32.totalorder 1, %s22
      %p251 = scmp.lt.s32.totalorder %s22, 3
      %p252 = pnand %p250, %p251
      %p253 = pneg %p252
      // Predicated region
      $region9: #{tpu_custom_call.1} parent=5 // pred_check
        _
      $region10: #{tpu_custom_call.1} parent=5 // pred_check_branch
        %255 = sbr.rel (%p252) target = $region12
      $region11: #{tpu_custom_call.1} parent=5 // pred_region
        %s256 = ssub.s32 %s22, 1
        // Predicated region
        $region13: #{tpu_custom_call.1} parent=11 // pred_check
          %p257 = pneg %p69
        $region14: #{tpu_custom_call.1} parent=11 // pred_check_branch
          %259 = sbr.rel (%p257) target = $region16
        $region15: #{tpu_custom_call.1} parent=11 // pred_region
          %s261 = ssub.s32 64, 64
          %262 = vsyncadd [#allocation6], %s261
          %s264 = sshll.u32 [#allocation5], 4
          %s265 = int_to_ptr.vmem [resolvable:$true] %s264
          %267 = dma.hbm_to_vmem [thread:$0]  %s1, 64, %s265, [#allocation6]
        $region16: #{tpu_custom_call.1} parent=11 // pred_fallthru
          _
        // Predicated region
        $region17: #{tpu_custom_call.1} parent=11 // pred_check
          %p268 = pneg %p90
        $region18: #{tpu_custom_call.1} parent=11 // pred_check_branch
          %270 = sbr.rel (%p268) target = $region20
        $region19: #{tpu_custom_call.1} parent=11 // pred_region
          _
        $region20: #{tpu_custom_call.1} parent=11 // pred_fallthru
          _
        // Predicated region
        $region21: #{tpu_custom_call.1} parent=11 // pred_check
          %p271 = pneg %p111
        $region22: #{tpu_custom_call.1} parent=11 // pred_check_branch
          %273 = sbr.rel (%p271) target = $region24
        $region23: #{tpu_custom_call.1} parent=11 // pred_region
          _
        $region24: #{tpu_custom_call.1} parent=11 // pred_fallthru
          _
        // Predicated region
        $region25: #{tpu_custom_call.1} parent=11 // pred_check
          %p274 = pneg %p132
        $region26: #{tpu_custom_call.1} parent=11 // pred_check_branch
          %276 = sbr.rel (%p274) target = $region28
        $region27: #{tpu_custom_call.1} parent=11 // pred_region
          _
        $region28: #{tpu_custom_call.1} parent=11 // pred_fallthru
          _
        // Predicated region
        $region29: #{tpu_custom_call.1} parent=11 // pred_check
          %p277 = pneg %p153
        $region30: #{tpu_custom_call.1} parent=11 // pred_check_branch
          %279 = sbr.rel (%p277) target = $region32
        $region31: #{tpu_custom_call.1} parent=11 // pred_region
          %s281 = ssub.s32 256, 256
          %282 = vsyncadd [#allocation6], %s281
          %s283 = sshll.u32 [#allocation7], 4
          %s284 = int_to_ptr.vmem [resolvable:$true] %s283
          %289 = dma.hbm_to_vmem [thread:$0]  %s5, 256, %s284, [#allocation6], 64, 64, 4
        $region32: #{tpu_custom_call.1} parent=11 // pred_fallthru
          _
        // Predicated region
        $region33: #{tpu_custom_call.1} parent=11 // pred_check
          %p290 = pneg %p174
        $region34: #{tpu_custom_call.1} parent=11 // pred_check_branch
          %292 = sbr.rel (%p290) target = $region36
        $region35: #{tpu_custom_call.1} parent=11 // pred_region
          _
        $region36: #{tpu_custom_call.1} parent=11 // pred_fallthru
          _
        // Predicated region
        $region37: #{tpu_custom_call.1} parent=11 // pred_check
          %p293 = pneg %p195
        $region38: #{tpu_custom_call.1} parent=11 // pred_check_branch
          %295 = sbr.rel (%p293) target = $region40
        $region39: #{tpu_custom_call.1} parent=11 // pred_region
          _
        $region40: #{tpu_custom_call.1} parent=11 // pred_fallthru
          _
        // Predicated region
        $region41: #{tpu_custom_call.1} parent=11 // pred_check
          %p296 = pneg %p216
        $region42: #{tpu_custom_call.1} parent=11 // pred_check_branch
          %298 = sbr.rel (%p296) target = $region44
        $region43: #{tpu_custom_call.1} parent=11 // pred_region
          _
        $region44: #{tpu_custom_call.1} parent=11 // pred_fallthru
          _
      $region12: #{tpu_custom_call.1} parent=5 // pred_fallthru
        _
      %p299 = scmp.lt.s32.totalorder %s22, 2
      // Predicated region
      $region45: #{tpu_custom_call.1} parent=5 // pred_check
        %p300 = pneg %p299
      $region46: #{tpu_custom_call.1} parent=5 // pred_check_branch
        %302 = sbr.rel (%p300) target = $region48
      $region47: #{tpu_custom_call.1} parent=5 // pred_region
        // Predicated region
        $region49: #{tpu_custom_call.1} parent=47 // pred_check
          %p303 = pneg %p42
        $region50: #{tpu_custom_call.1} parent=47 // pred_check_branch
          %305 = sbr.rel (%p303) target = $region52
        $region51: #{tpu_custom_call.1} parent=47 // pred_region
          %s306 = sand.u32 %s32, 1
          %s307 = scalar_lea.sflag [#allocation3], %s306
          %s308 = sand.u32 %s32, 1
          %s309 = smul.addr %s308, 4
          %s310 = scalar_lea.vmem [#allocation2], %s309
          %s312 = ssub.s32 64, 64
          %313 = vsyncadd %s307, %s312
          %s314 = smul.addr %s22, 64
          %s315 = scalar_lea.hbm %s0, %s314
          %s317 = sshll.u32 %s310, 4
          %s318 = int_to_ptr.vmem [resolvable:$true] %s317
          %320 = dma.hbm_to_vmem [thread:$0]  %s315, 64, %s318, %s307
        $region52: #{tpu_custom_call.1} parent=47 // pred_fallthru
          _
      $region48: #{tpu_custom_call.1} parent=5 // pred_fallthru
        _
      %p321 = scmp.le.s32.totalorder 1, %s22
      %p322 = scmp.lt.s32.totalorder %s22, 3
      %p323 = pnand %p321, %p322
      %p324 = pneg %p323
      // Predicated region
      $region53: #{tpu_custom_call.1} parent=5 // pred_check
        _
      $region54: #{tpu_custom_call.1} parent=5 // pred_check_branch
        %326 = sbr.rel (%p323) target = $region56
      $region55: #{tpu_custom_call.1} parent=5 // pred_region
        %s327 = ssub.s32 %s22, 1
        %s328 = sand.u32 %s35, 1
        %s329 = scalar_lea.sflag [#allocation3], %s328
        %s330 = sand.u32 %s35, 1
        %s331 = smul.addr %s330, 4
        %s332 = scalar_lea.vmem [#allocation2], %s331
        // Predicated region
        $region57: #{tpu_custom_call.1} parent=55 // pred_check
          %p333 = pneg %p48
        $region58: #{tpu_custom_call.1} parent=55 // pred_check_branch
          %335 = sbr.rel (%p333) target = $region60
        $region59: #{tpu_custom_call.1} parent=55 // pred_region
          %336 = dma.done %s329, 64
        $region60: #{tpu_custom_call.1} parent=55 // pred_fallthru
          _
        // Predicated region
        $region61: #{tpu_custom_call.1} parent=55 // pred_check
          %p337 = pneg %p69
        $region62: #{tpu_custom_call.1} parent=55 // pred_check_branch
          %339 = sbr.rel (%p337) target = $region64
        $region63: #{tpu_custom_call.1} parent=55 // pred_region
          %340 = dma.done [#allocation6], 64
        $region64: #{tpu_custom_call.1} parent=55 // pred_fallthru
          _
        // Predicated region
        $region65: #{tpu_custom_call.1} parent=55 // pred_check
          %p341 = pneg %p153
        $region66: #{tpu_custom_call.1} parent=55 // pred_check_branch
          %343 = sbr.rel (%p341) target = $region68
        $region67: #{tpu_custom_call.1} parent=55 // pred_region
          %344 = dma.done [#allocation6], 256
        $region68: #{tpu_custom_call.1} parent=55 // pred_fallthru
          _
        %s345 = sand.u32 %s35, 1
        %s346 = scalar_lea.sflag [#allocation3], %s345
        %s347 = sand.u32 %s35, 1
        %s348 = smul.addr %s347, 4
        %s349 = scalar_lea.vmem [#allocation2], %s348
        %p350 = pneg %p48
        %p351 = pneg %p45
        %p352 = pneg %p69
        %p353 = pneg %p66
        %p354 = pneg %p90
        %p355 = pneg %p87
        %p356 = pneg %p111
        %p357 = pneg %p108
        %p358 = pneg %p132
        %p359 = pneg %p129
        %p360 = pneg %p153
        %p361 = pneg %p150
        %p362 = pneg %p174
        %p363 = pneg %p171
        %p364 = pneg %p195
        %p365 = pneg %p192
        %p366 = pneg %p216
        %p367 = pneg %p213
        %p368 = pneg %p242
        %p369 = pneg %p239
        %s370 = sand.u32 %s229, 1
        %s371 = scalar_lea.sflag [#allocation4], %s370
        %s372 = sand.u32 %s229, 1
        %s373 = scalar_lea.vmem [#allocation8], %s372
        %v375 = vld [vmem:[%s332] sm:$0xf]
        %v376 = vld [vmem:[%s2] sm:$0xff]
        %v377 = vld [vmem:[%s2 + $0x8] sm:$0xff]
        %v378 = vld [vmem:[%s2 + $0x10] sm:$0xff]
        %v379 = vld [vmem:[%s2 + $0x18] sm:$0xff]
        %v380 = vld [vmem:[%s2 + $0x20] sm:$0xff]
        %v381 = vld [vmem:[%s2 + $0x28] sm:$0xff]
        %v382 = vld [vmem:[%s2 + $0x30] sm:$0xff]
        %v383 = vld [vmem:[%s2 + $0x38] sm:$0xff]
        %v392 = vunpack.c.l.b16 %v376
        %v393 = vunpack.c.h.b16 %v376
        %v394 = vunpack.c.l.b16 %v377
        %v395 = vunpack.c.h.b16 %v377
        %v396 = vunpack.c.l.b16 %v378
        %v397 = vunpack.c.h.b16 %v378
        %v398 = vunpack.c.l.b16 %v379
        %v399 = vunpack.c.h.b16 %v379
        %v400 = vunpack.c.l.b16 %v380
        %v401 = vunpack.c.h.b16 %v380
        %v402 = vunpack.c.l.b16 %v381
        %v403 = vunpack.c.h.b16 %v381
        %v404 = vunpack.c.l.b16 %v382
        %v405 = vunpack.c.h.b16 %v382
        %v406 = vunpack.c.l.b16 %v383
        %v407 = vunpack.c.h.b16 %v383
        %v408 = vpack.c.b16 %v400, %v392
        %v409 = vpack.c.b16 %v401, %v393
        %v410 = vpack.c.b16 %v402, %v394
        %v411 = vpack.c.b16 %v403, %v395
        %v412 = vpack.c.b16 %v404, %v396
        %v413 = vpack.c.b16 %v405, %v397
        %v414 = vpack.c.b16 %v406, %v398
        %v415 = vpack.c.b16 %v407, %v399
        %vm424 = vcmask 130048
        %v426 = vsel %vm424, %v375, 0
        %428 = vmatprep.subr.bf16.mxu0 %v409
        %429 = vmatpush1.bf16.msra.mxu0 %v408
        %430 = vmatprep.subr.bf16.mxu0 0
        %431 = vmatpush1.bf16.msra.mxu0 0
        %432 = vmatprep.subr.bf16.mxu0 0
        %433 = vmatpush1.bf16.msra.mxu0 0
        %434 = vmatprep.subr.bf16.mxu0 0
        %435 = vmatpush1.bf16.msra.mxu0 0
        %436 = vmatprep.subr.bf16.mxu0 0
        %437 = vmatpush1.bf16.msra.mxu0 0
        %438 = vmatprep.subr.bf16.mxu0 0
        %439 = vmatpush1.bf16.msra.mxu0 0
        %440 = vmatprep.subr.bf16.mxu0 0
        %441 = vmatpush1.bf16.msra.mxu0 0
        %442 = vmatprep.subr.bf16.mxu0 0
        %443 = vmatpush1.bf16.msra.mxu0 0
        %444 = vmatprep.subr.bf16.mxu0 0
        %445 = vmatpush1.bf16.msra.mxu0 0
        %446 = vmatprep.subr.bf16.mxu0 0
        %447 = vmatpush1.bf16.msra.mxu0 0
        %448 = vmatprep.subr.bf16.mxu0 0
        %449 = vmatpush1.bf16.msra.mxu0 0
        %450 = vmatprep.subr.bf16.mxu0 0
        %451 = vmatpush1.bf16.msra.mxu0 0
        %452 = vmatprep.subr.bf16.mxu0 0
        %453 = vmatpush1.bf16.msra.mxu0 0
        %454 = vmatprep.subr.bf16.mxu0 0
        %455 = vmatpush1.bf16.msra.mxu0 0
        %456 = vmatprep.subr.bf16.mxu0 0
        %457 = vmatpush1.bf16.msra.mxu0 0
        %458 = vmatprep.subr.bf16.mxu0 0
        %459 = vmatpush1.bf16.msra.mxu0 0
        %460 = vmatprep.mubr.bf16.mxu0 0
        %461 = vmatmul.mubr.bf16.gmra.mrb[0].mxu0 %v426
        %v462 = vpop.f32.mrb[0].mxu0
        %v463 = vadd.f32 0.0, %v462
        %v464 = vpop.f32.mrb[0].mxu0
        %v465 = vadd.f32 0.0, %v464
        %v466 = vpop.f32.mrb[0].mxu0
        %v467 = vpop.f32.mrb[0].mxu0
        %468 = vdwg.mxu0
        %469 = vmatprep.subr.bf16.mxu0 %v411
        %470 = vmatpush1.bf16.msra.mxu0 %v410
        %471 = vmatprep.subr.bf16.mxu0 0
        %472 = vmatpush1.bf16.msra.mxu0 0
        %473 = vmatprep.subr.bf16.mxu0 0
        %474 = vmatpush1.bf16.msra.mxu0 0
        %475 = vmatprep.subr.bf16.mxu0 0
        %476 = vmatpush1.bf16.msra.mxu0 0
        %477 = vmatprep.subr.bf16.mxu0 0
        %478 = vmatpush1.bf16.msra.mxu0 0
        %479 = vmatprep.subr.bf16.mxu0 0
        %480 = vmatpush1.bf16.msra.mxu0 0
        %481 = vmatprep.subr.bf16.mxu0 0
        %482 = vmatpush1.bf16.msra.mxu0 0
        %483 = vmatprep.subr.bf16.mxu0 0
        %484 = vmatpush1.bf16.msra.mxu0 0
        %485 = vmatprep.subr.bf16.mxu0 0
        %486 = vmatpush1.bf16.msra.mxu0 0
        %487 = vmatprep.subr.bf16.mxu0 0
        %488 = vmatpush1.bf16.msra.mxu0 0
        %489 = vmatprep.subr.bf16.mxu0 0
        %490 = vmatpush1.bf16.msra.mxu0 0
        %491 = vmatprep.subr.bf16.mxu0 0
        %492 = vmatpush1.bf16.msra.mxu0 0
        %493 = vmatprep.subr.bf16.mxu0 0
        %494 = vmatpush1.bf16.msra.mxu0 0
        %495 = vmatprep.subr.bf16.mxu0 0
        %496 = vmatpush1.bf16.msra.mxu0 0
        %497 = vmatprep.subr.bf16.mxu0 0
        %498 = vmatpush1.bf16.msra.mxu0 0
        %499 = vmatprep.subr.bf16.mxu0 0
        %500 = vmatpush1.bf16.msra.mxu0 0
        %501 = vmatprep.mubr.bf16.mxu0 0
        %502 = vmatmul.mubr.bf16.gmra.mrb[0].mxu0 %v426
        %v503 = vpop.f32.mrb[0].mxu0
        %v504 = vadd.f32 0.0, %v503
        %v505 = vpop.f32.mrb[0].mxu0
        %v506 = vadd.f32 0.0, %v505
        %v507 = vpop.f32.mrb[0].mxu0
        %v508 = vpop.f32.mrb[0].mxu0
        %509 = vdwg.mxu0
        %510 = vmatprep.subr.bf16.mxu0 %v413
        %511 = vmatpush1.bf16.msra.mxu0 %v412
        %512 = vmatprep.subr.bf16.mxu0 0
        %513 = vmatpush1.bf16.msra.mxu0 0
        %514 = vmatprep.subr.bf16.mxu0 0
        %515 = vmatpush1.bf16.msra.mxu0 0
        %516 = vmatprep.subr.bf16.mxu0 0
        %517 = vmatpush1.bf16.msra.mxu0 0
        %518 = vmatprep.subr.bf16.mxu0 0
        %519 = vmatpush1.bf16.msra.mxu0 0
        %520 = vmatprep.subr.bf16.mxu0 0
        %521 = vmatpush1.bf16.msra.mxu0 0
        %522 = vmatprep.subr.bf16.mxu0 0
        %523 = vmatpush1.bf16.msra.mxu0 0
        %524 = vmatprep.subr.bf16.mxu0 0
        %525 = vmatpush1.bf16.msra.mxu0 0
        %526 = vmatprep.subr.bf16.mxu0 0
        %527 = vmatpush1.bf16.msra.mxu0 0
        %528 = vmatprep.subr.bf16.mxu0 0
        %529 = vmatpush1.bf16.msra.mxu0 0
        %530 = vmatprep.subr.bf16.mxu0 0
        %531 = vmatpush1.bf16.msra.mxu0 0
        %532 = vmatprep.subr.bf16.mxu0 0
        %533 = vmatpush1.bf16.msra.mxu0 0
        %534 = vmatprep.subr.bf16.mxu0 0
        %535 = vmatpush1.bf16.msra.mxu0 0
        %536 = vmatprep.subr.bf16.mxu0 0
        %537 = vmatpush1.bf16.msra.mxu0 0
        %538 = vmatprep.subr.bf16.mxu0 0
        %539 = vmatpush1.bf16.msra.mxu0 0
        %540 = vmatprep.subr.bf16.mxu0 0
        %541 = vmatpush1.bf16.msra.mxu0 0
        %542 = vmatprep.mubr.bf16.mxu0 0
        %543 = vmatmul.mubr.bf16.gmra.mrb[0].mxu0 %v426
        %v544 = vpop.f32.mrb[0].mxu0
        %v545 = vadd.f32 0.0, %v544
        %v546 = vpop.f32.mrb[0].mxu0
        %v547 = vadd.f32 0.0, %v546
        %v548 = vpop.f32.mrb[0].mxu0
        %v549 = vpop.f32.mrb[0].mxu0
        %550 = vdwg.mxu0
        %551 = vmatprep.subr.bf16.mxu0 %v415
        %552 = vmatpush1.bf16.msra.mxu0 %v414
        %553 = vmatprep.subr.bf16.mxu0 0
        %554 = vmatpush1.bf16.msra.mxu0 0
        %555 = vmatprep.subr.bf16.mxu0 0
        %556 = vmatpush1.bf16.msra.mxu0 0
        %557 = vmatprep.subr.bf16.mxu0 0
        %558 = vmatpush1.bf16.msra.mxu0 0
        %559 = vmatprep.subr.bf16.mxu0 0
        %560 = vmatpush1.bf16.msra.mxu0 0
        %561 = vmatprep.subr.bf16.mxu0 0
        %562 = vmatpush1.bf16.msra.mxu0 0
        %563 = vmatprep.subr.bf16.mxu0 0
        %564 = vmatpush1.bf16.msra.mxu0 0
        %565 = vmatprep.subr.bf16.mxu0 0
        %566 = vmatpush1.bf16.msra.mxu0 0
        %567 = vmatprep.subr.bf16.mxu0 0
        %568 = vmatpush1.bf16.msra.mxu0 0
        %569 = vmatprep.subr.bf16.mxu0 0
        %570 = vmatpush1.bf16.msra.mxu0 0
        %571 = vmatprep.subr.bf16.mxu0 0
        %572 = vmatpush1.bf16.msra.mxu0 0
        %573 = vmatprep.subr.bf16.mxu0 0
        %574 = vmatpush1.bf16.msra.mxu0 0
        %575 = vmatprep.subr.bf16.mxu0 0
        %576 = vmatpush1.bf16.msra.mxu0 0
        %577 = vmatprep.subr.bf16.mxu0 0
        %578 = vmatpush1.bf16.msra.mxu0 0
        %579 = vmatprep.subr.bf16.mxu0 0
        %580 = vmatpush1.bf16.msra.mxu0 0
        %581 = vmatprep.subr.bf16.mxu0 0
        %582 = vmatpush1.bf16.msra.mxu0 0
        %583 = vmatprep.mubr.bf16.mxu0 0
        %584 = vmatmul.mubr.bf16.gmra.mrb[0].mxu0 %v426
        %v585 = vpop.f32.mrb[0].mxu0
        %v586 = vadd.f32 0.0, %v585
        %v587 = vpop.f32.mrb[0].mxu0
        %v588 = vadd.f32 0.0, %v587
        %v589 = vpop.f32.mrb[0].mxu0
        %v590 = vpop.f32.mrb[0].mxu0
        %591 = vdwg.mxu0
        %v592 = vpack.c.bf16 %v463, %v463
        %v593 = vpack.c.bf16 %v465, %v465
        %v594 = vpack.c.bf16 %v504, %v504
        %v595 = vpack.c.bf16 %v506, %v506
        %v596 = vpack.c.bf16 %v545, %v545
        %v597 = vpack.c.bf16 %v547, %v547
        %v598 = vpack.c.bf16 %v586, %v586
        %v599 = vpack.c.bf16 %v588, %v588
        %v600 = vld [vmem:[#allocation5] sm:$0xf]
        %vm601 = vcmask 64512
        %v603 = vsel %vm601, %v600, 0
        %vm605 = vcmask 1043456
        %v607 = vsel %vm605, %v592, 0
        %v610 = vsel %vm605, %v593, 0
        %v613 = vsel %vm605, %v594, 0
        %v616 = vsel %vm605, %v595, 0
        %v619 = vsel %vm605, %v596, 0
        %v622 = vsel %vm605, %v597, 0
        %v625 = vsel %vm605, %v598, 0
        %v628 = vsel %vm605, %v599, 0
        %630 = vmatprep.subr.bf16.mxu0 %v610
        %631 = vmatpush1.bf16.msra.mxu0 %v607
        %632 = vmatprep.subr.bf16.mxu0 0
        %633 = vmatpush1.bf16.msra.mxu0 0
        %634 = vmatprep.subr.bf16.mxu0 0
        %635 = vmatpush1.bf16.msra.mxu0 0
        %636 = vmatprep.subr.bf16.mxu0 0
        %637 = vmatpush1.bf16.msra.mxu0 0
        %638 = vmatprep.subr.bf16.mxu0 0
        %639 = vmatpush1.bf16.msra.mxu0 0
        %640 = vmatprep.subr.bf16.mxu0 0
        %641 = vmatpush1.bf16.msra.mxu0 0
        %642 = vmatprep.subr.bf16.mxu0 0
        %643 = vmatpush1.bf16.msra.mxu0 0
        %644 = vmatprep.subr.bf16.mxu0 0
        %645 = vmatpush1.bf16.msra.mxu0 0
        %646 = vmatprep.subr.bf16.mxu0 0
        %647 = vmatpush1.bf16.msra.mxu0 0
        %648 = vmatprep.subr.bf16.mxu0 0
        %649 = vmatpush1.bf16.msra.mxu0 0
        %650 = vmatprep.subr.bf16.mxu0 0
        %651 = vmatpush1.bf16.msra.mxu0 0
        %652 = vmatprep.subr.bf16.mxu0 0
        %653 = vmatpush1.bf16.msra.mxu0 0
        %654 = vmatprep.subr.bf16.mxu0 0
        %655 = vmatpush1.bf16.msra.mxu0 0
        %656 = vmatprep.subr.bf16.mxu0 0
        %657 = vmatpush1.bf16.msra.mxu0 0
        %658 = vmatprep.subr.bf16.mxu0 0
        %659 = vmatpush1.bf16.msra.mxu0 0
        %660 = vmatprep.subr.bf16.mxu0 0
        %661 = vmatpush1.bf16.msra.mxu0 0
        %662 = vmatprep.mubr.bf16.mxu0 0
        %663 = vmatmul.mubr.bf16.gmra.mrb[0].mxu0 %v603
        %v664 = vpop.f32.mrb[0].mxu0
        %v665 = vadd.f32 0.0, %v664
        %v666 = vpop.f32.mrb[0].mxu0
        %v667 = vadd.f32 0.0, %v666
        %v668 = vpop.f32.mrb[0].mxu0
        %v669 = vpop.f32.mrb[0].mxu0
        %670 = vdwg.mxu0
        %671 = vmatprep.subr.bf16.mxu0 %v616
        %672 = vmatpush1.bf16.msra.mxu0 %v613
        %673 = vmatprep.subr.bf16.mxu0 0
        %674 = vmatpush1.bf16.msra.mxu0 0
        %675 = vmatprep.subr.bf16.mxu0 0
        %676 = vmatpush1.bf16.msra.mxu0 0
        %677 = vmatprep.subr.bf16.mxu0 0
        %678 = vmatpush1.bf16.msra.mxu0 0
        %679 = vmatprep.subr.bf16.mxu0 0
        %680 = vmatpush1.bf16.msra.mxu0 0
        %681 = vmatprep.subr.bf16.mxu0 0
        %682 = vmatpush1.bf16.msra.mxu0 0
        %683 = vmatprep.subr.bf16.mxu0 0
        %684 = vmatpush1.bf16.msra.mxu0 0
        %685 = vmatprep.subr.bf16.mxu0 0
        %686 = vmatpush1.bf16.msra.mxu0 0
        %687 = vmatprep.subr.bf16.mxu0 0
        %688 = vmatpush1.bf16.msra.mxu0 0
        %689 = vmatprep.subr.bf16.mxu0 0
        %690 = vmatpush1.bf16.msra.mxu0 0
        %691 = vmatprep.subr.bf16.mxu0 0
        %692 = vmatpush1.bf16.msra.mxu0 0
        %693 = vmatprep.subr.bf16.mxu0 0
        %694 = vmatpush1.bf16.msra.mxu0 0
        %695 = vmatprep.subr.bf16.mxu0 0
        %696 = vmatpush1.bf16.msra.mxu0 0
        %697 = vmatprep.subr.bf16.mxu0 0
        %698 = vmatpush1.bf16.msra.mxu0 0
        %699 = vmatprep.subr.bf16.mxu0 0
        %700 = vmatpush1.bf16.msra.mxu0 0
        %701 = vmatprep.subr.bf16.mxu0 0
        %702 = vmatpush1.bf16.msra.mxu0 0
        %703 = vmatprep.mubr.bf16.mxu0 0
        %704 = vmatmul.mubr.bf16.gmra.mrb[0].mxu0 %v603
        %v705 = vpop.f32.mrb[0].mxu0
        %v706 = vadd.f32 0.0, %v705
        %v707 = vpop.f32.mrb[0].mxu0
        %v708 = vadd.f32 0.0, %v707
        %v709 = vpop.f32.mrb[0].mxu0
        %v710 = vpop.f32.mrb[0].mxu0
        %711 = vdwg.mxu0
        %712 = vmatprep.subr.bf16.mxu0 %v622
        %713 = vmatpush1.bf16.msra.mxu0 %v619
        %714 = vmatprep.subr.bf16.mxu0 0
        %715 = vmatpush1.bf16.msra.mxu0 0
        %716 = vmatprep.subr.bf16.mxu0 0
        %717 = vmatpush1.bf16.msra.mxu0 0
        %718 = vmatprep.subr.bf16.mxu0 0
        %719 = vmatpush1.bf16.msra.mxu0 0
        %720 = vmatprep.subr.bf16.mxu0 0
        %721 = vmatpush1.bf16.msra.mxu0 0
        %722 = vmatprep.subr.bf16.mxu0 0
        %723 = vmatpush1.bf16.msra.mxu0 0
        %724 = vmatprep.subr.bf16.mxu0 0
        %725 = vmatpush1.bf16.msra.mxu0 0
        %726 = vmatprep.subr.bf16.mxu0 0
        %727 = vmatpush1.bf16.msra.mxu0 0
        %728 = vmatprep.subr.bf16.mxu0 0
        %729 = vmatpush1.bf16.msra.mxu0 0
        %730 = vmatprep.subr.bf16.mxu0 0
        %731 = vmatpush1.bf16.msra.mxu0 0
        %732 = vmatprep.subr.bf16.mxu0 0
        %733 = vmatpush1.bf16.msra.mxu0 0
        %734 = vmatprep.subr.bf16.mxu0 0
        %735 = vmatpush1.bf16.msra.mxu0 0
        %736 = vmatprep.subr.bf16.mxu0 0
        %737 = vmatpush1.bf16.msra.mxu0 0
        %738 = vmatprep.subr.bf16.mxu0 0
        %739 = vmatpush1.bf16.msra.mxu0 0
        %740 = vmatprep.subr.bf16.mxu0 0
        %741 = vmatpush1.bf16.msra.mxu0 0
        %742 = vmatprep.subr.bf16.mxu0 0
        %743 = vmatpush1.bf16.msra.mxu0 0
        %744 = vmatprep.mubr.bf16.mxu0 0
        %745 = vmatmul.mubr.bf16.gmra.mrb[0].mxu0 %v603
        %v746 = vpop.f32.mrb[0].mxu0
        %v747 = vadd.f32 0.0, %v746
        %v748 = vpop.f32.mrb[0].mxu0
        %v749 = vadd.f32 0.0, %v748
        %v750 = vpop.f32.mrb[0].mxu0
        %v751 = vpop.f32.mrb[0].mxu0
        %752 = vdwg.mxu0
        %753 = vmatprep.subr.bf16.mxu0 %v628
        %754 = vmatpush1.bf16.msra.mxu0 %v625
        %755 = vmatprep.subr.bf16.mxu0 0
        %756 = vmatpush1.bf16.msra.mxu0 0
        %757 = vmatprep.subr.bf16.mxu0 0
        %758 = vmatpush1.bf16.msra.mxu0 0
        %759 = vmatprep.subr.bf16.mxu0 0
        %760 = vmatpush1.bf16.msra.mxu0 0
        %761 = vmatprep.subr.bf16.mxu0 0
        %762 = vmatpush1.bf16.msra.mxu0 0
        %763 = vmatprep.subr.bf16.mxu0 0
        %764 = vmatpush1.bf16.msra.mxu0 0
        %765 = vmatprep.subr.bf16.mxu0 0
        %766 = vmatpush1.bf16.msra.mxu0 0
        %767 = vmatprep.subr.bf16.mxu0 0
        %768 = vmatpush1.bf16.msra.mxu0 0
        %769 = vmatprep.subr.bf16.mxu0 0
        %770 = vmatpush1.bf16.msra.mxu0 0
        %771 = vmatprep.subr.bf16.mxu0 0
        %772 = vmatpush1.bf16.msra.mxu0 0
        %773 = vmatprep.subr.bf16.mxu0 0
        %774 = vmatpush1.bf16.msra.mxu0 0
        %775 = vmatprep.subr.bf16.mxu0 0
        %776 = vmatpush1.bf16.msra.mxu0 0
        %777 = vmatprep.subr.bf16.mxu0 0
        %778 = vmatpush1.bf16.msra.mxu0 0
        %779 = vmatprep.subr.bf16.mxu0 0
        %780 = vmatpush1.bf16.msra.mxu0 0
        %781 = vmatprep.subr.bf16.mxu0 0
        %782 = vmatpush1.bf16.msra.mxu0 0
        %783 = vmatprep.subr.bf16.mxu0 0
        %784 = vmatpush1.bf16.msra.mxu0 0
        %785 = vmatprep.mubr.bf16.mxu0 0
        %786 = vmatmul.mubr.bf16.gmra.mrb[0].mxu0 %v603
        %v787 = vpop.f32.mrb[0].mxu0
        %v788 = vadd.f32 0.0, %v787
        %v789 = vpop.f32.mrb[0].mxu0
        %v790 = vadd.f32 0.0, %v789
        %v791 = vpop.f32.mrb[0].mxu0
        %v792 = vpop.f32.mrb[0].mxu0
        %793 = vdwg.mxu0
        %v794 = vmax.f32 %v665, 0.0
        %v795 = vmax.f32 %v667, 0.0
        %v796 = vmax.f32 %v706, 0.0
        %v797 = vmax.f32 %v708, 0.0
        %v798 = vmax.f32 %v747, 0.0
        %v799 = vmax.f32 %v749, 0.0
        %v800 = vmax.f32 %v788, 0.0
        %v801 = vmax.f32 %v790, 0.0
        %v802 = vpack.c.bf16 %v794, %v794
        %v803 = vpack.c.bf16 %v795, %v795
        %v804 = vpack.c.bf16 %v796, %v796
        %v805 = vpack.c.bf16 %v797, %v797
        %v806 = vpack.c.bf16 %v798, %v798
        %v807 = vpack.c.bf16 %v799, %v799
        %v808 = vpack.c.bf16 %v800, %v800
        %v809 = vpack.c.bf16 %v801, %v801
        %v810 = vld [vmem:[%s3] sm:$0xf]
        %v811 = vld [vmem:[%s3 + $0x4] sm:$0xf]
        %v812 = vld [vmem:[%s3 + $0x8] sm:$0xf]
        %v813 = vld [vmem:[%s3 + $0xc] sm:$0xf]
        %v814 = vld [vmem:[%s4] sm:$0xff]
        %v815 = vld [vmem:[%s4 + $0x8] sm:$0xff]
        %v816 = vld [vmem:[%s4 + $0x10] sm:$0xff]
        %v817 = vld [vmem:[%s4 + $0x18] sm:$0xff]
        %819 = vset.pattern.permute.xlu0 0
        %820 = vperm.xlu0 %819, %v814
        %v821 = vpop.permute.xlu0 %820
        %824 = vset.pattern.permute.xlu0 0
        %825 = vperm.xlu0 %824, %v815
        %v826 = vpop.permute.xlu0 %825
        %829 = vset.pattern.permute.xlu0 0
        %830 = vperm.xlu0 %829, %v816
        %v831 = vpop.permute.xlu0 %830
        %834 = vset.pattern.permute.xlu0 0
        %835 = vperm.xlu0 %834, %v817
        %v836 = vpop.permute.xlu0 %835
        %v842 = vunpack.c.l.b16 %v810
        %v843 = vunpack.c.l.b16 %v811
        %v844 = vunpack.c.l.b16 %v812
        %v845 = vunpack.c.l.b16 %v813
        %v846 = vpack.c.b16 %v843, %v842
        %v847 = vpack.c.b16 %v845, %v844
        %v849 = vsel %vm601, %v846, 0
        %v852 = vsel %vm601, %v847, 0
        %v855 = vsel %vm605, %v802, 0
        %v858 = vsel %vm605, %v803, 0
        %v861 = vsel %vm605, %v804, 0
        %v864 = vsel %vm605, %v805, 0
        %v867 = vsel %vm605, %v806, 0
        %v870 = vsel %vm605, %v807, 0
        %v873 = vsel %vm605, %v808, 0
        %v876 = vsel %vm605, %v809, 0
        %878 = vmatprep.subr.bf16.mxu0 %v858
        %879 = vmatpush1.bf16.msra.mxu0 %v855
        %880 = vmatprep.subr.bf16.mxu0 0
        %881 = vmatpush1.bf16.msra.mxu0 0
        %882 = vmatprep.subr.bf16.mxu0 0
        %883 = vmatpush1.bf16.msra.mxu0 0
        %884 = vmatprep.subr.bf16.mxu0 0
        %885 = vmatpush1.bf16.msra.mxu0 0
        %886 = vmatprep.subr.bf16.mxu0 0
        %887 = vmatpush1.bf16.msra.mxu0 0
        %888 = vmatprep.subr.bf16.mxu0 0
        %889 = vmatpush1.bf16.msra.mxu0 0
        %890 = vmatprep.subr.bf16.mxu0 0
        %891 = vmatpush1.bf16.msra.mxu0 0
        %892 = vmatprep.subr.bf16.mxu0 0
        %893 = vmatpush1.bf16.msra.mxu0 0
        %894 = vmatprep.subr.bf16.mxu0 0
        %895 = vmatpush1.bf16.msra.mxu0 0
        %896 = vmatprep.subr.bf16.mxu0 0
        %897 = vmatpush1.bf16.msra.mxu0 0
        %898 = vmatprep.subr.bf16.mxu0 0
        %899 = vmatpush1.bf16.msra.mxu0 0
        %900 = vmatprep.subr.bf16.mxu0 0
        %901 = vmatpush1.bf16.msra.mxu0 0
        %902 = vmatprep.subr.bf16.mxu0 0
        %903 = vmatpush1.bf16.msra.mxu0 0
        %904 = vmatprep.subr.bf16.mxu0 0
        %905 = vmatpush1.bf16.msra.mxu0 0
        %906 = vmatprep.subr.bf16.mxu0 0
        %907 = vmatpush1.bf16.msra.mxu0 0
        %908 = vmatprep.subr.bf16.mxu0 0
        %909 = vmatpush1.bf16.msra.mxu0 0
        %910 = vmatprep.mubr.bf16.mxu0 0
        %911 = vmatmul.mubr.bf16.gmra.mrb[0].mxu0 %v849
        %v912 = vpop.f32.mrb[0].mxu0
        %v913 = vadd.f32 %v821, %v912
        %v914 = vpop.f32.mrb[0].mxu0
        %v915 = vadd.f32 %v821, %v914
        %v916 = vpop.f32.mrb[0].mxu0
        %v917 = vadd.f32 %v826, %v916
        %v918 = vpop.f32.mrb[0].mxu0
        %v919 = vadd.f32 %v826, %v918
        %920 = vmatprep.mubr.bf16.mxu0 0
        %921 = vmatmul.mubr.bf16.gmra.mrb[0].mxu0 %v852
        %v922 = vpop.f32.mrb[0].mxu0
        %v923 = vadd.f32 %v831, %v922
        %v924 = vpop.f32.mrb[0].mxu0
        %v925 = vadd.f32 %v831, %v924
        %v926 = vpop.f32.mrb[0].mxu0
        %v927 = vadd.f32 %v836, %v926
        %v928 = vpop.f32.mrb[0].mxu0
        %v929 = vadd.f32 %v836, %v928
        %930 = vdwg.mxu0
        %931 = vmatprep.subr.bf16.mxu0 %v864
        %932 = vmatpush1.bf16.msra.mxu0 %v861
        %933 = vmatprep.subr.bf16.mxu0 0
        %934 = vmatpush1.bf16.msra.mxu0 0
        %935 = vmatprep.subr.bf16.mxu0 0
        %936 = vmatpush1.bf16.msra.mxu0 0
        %937 = vmatprep.subr.bf16.mxu0 0
        %938 = vmatpush1.bf16.msra.mxu0 0
        %939 = vmatprep.subr.bf16.mxu0 0
        %940 = vmatpush1.bf16.msra.mxu0 0
        %941 = vmatprep.subr.bf16.mxu0 0
        %942 = vmatpush1.bf16.msra.mxu0 0
        %943 = vmatprep.subr.bf16.mxu0 0
        %944 = vmatpush1.bf16.msra.mxu0 0
        %945 = vmatprep.subr.bf16.mxu0 0
        %946 = vmatpush1.bf16.msra.mxu0 0
        %947 = vmatprep.subr.bf16.mxu0 0
        %948 = vmatpush1.bf16.msra.mxu0 0
        %949 = vmatprep.subr.bf16.mxu0 0
        %950 = vmatpush1.bf16.msra.mxu0 0
        %951 = vmatprep.subr.bf16.mxu0 0
        %952 = vmatpush1.bf16.msra.mxu0 0
        %953 = vmatprep.subr.bf16.mxu0 0
        %954 = vmatpush1.bf16.msra.mxu0 0
        %955 = vmatprep.subr.bf16.mxu0 0
        %956 = vmatpush1.bf16.msra.mxu0 0
        %957 = vmatprep.subr.bf16.mxu0 0
        %958 = vmatpush1.bf16.msra.mxu0 0
        %959 = vmatprep.subr.bf16.mxu0 0
        %960 = vmatpush1.bf16.msra.mxu0 0
        %961 = vmatprep.subr.bf16.mxu0 0
        %962 = vmatpush1.bf16.msra.mxu0 0
        %963 = vmatprep.mubr.bf16.mxu0 0
        %964 = vmatmul.mubr.bf16.gmra.mrb[0].mxu0 %v849
        %v965 = vpop.f32.mrb[0].mxu0
        %v966 = vadd.f32 %v821, %v965
        %v967 = vpop.f32.mrb[0].mxu0
        %v968 = vadd.f32 %v821, %v967
        %v969 = vpop.f32.mrb[0].mxu0
        %v970 = vadd.f32 %v826, %v969
        %v971 = vpop.f32.mrb[0].mxu0
        %v972 = vadd.f32 %v826, %v971
        %973 = vmatprep.mubr.bf16.mxu0 0
        %974 = vmatmul.mubr.bf16.gmra.mrb[0].mxu0 %v852
        %v975 = vpop.f32.mrb[0].mxu0
        %v976 = vadd.f32 %v831, %v975
        %v977 = vpop.f32.mrb[0].mxu0
        %v978 = vadd.f32 %v831, %v977
        %v979 = vpop.f32.mrb[0].mxu0
        %v980 = vadd.f32 %v836, %v979
        %v981 = vpop.f32.mrb[0].mxu0
        %v982 = vadd.f32 %v836, %v981
        %983 = vdwg.mxu0
        %984 = vmatprep.subr.bf16.mxu0 %v870
        %985 = vmatpush1.bf16.msra.mxu0 %v867
        %986 = vmatprep.subr.bf16.mxu0 0
        %987 = vmatpush1.bf16.msra.mxu0 0
        %988 = vmatprep.subr.bf16.mxu0 0
        %989 = vmatpush1.bf16.msra.mxu0 0
        %990 = vmatprep.subr.bf16.mxu0 0
        %991 = vmatpush1.bf16.msra.mxu0 0
        %992 = vmatprep.subr.bf16.mxu0 0
        %993 = vmatpush1.bf16.msra.mxu0 0
        %994 = vmatprep.subr.bf16.mxu0 0
        %995 = vmatpush1.bf16.msra.mxu0 0
        %996 = vmatprep.subr.bf16.mxu0 0
        %997 = vmatpush1.bf16.msra.mxu0 0
        %998 = vmatprep.subr.bf16.mxu0 0
        %999 = vmatpush1.bf16.msra.mxu0 0
        %1000 = vmatprep.subr.bf16.mxu0 0
        %1001 = vmatpush1.bf16.msra.mxu0 0
        %1002 = vmatprep.subr.bf16.mxu0 0
        %1003 = vmatpush1.bf16.msra.mxu0 0
        %1004 = vmatprep.subr.bf16.mxu0 0
        %1005 = vmatpush1.bf16.msra.mxu0 0
        %1006 = vmatprep.subr.bf16.mxu0 0
        %1007 = vmatpush1.bf16.msra.mxu0 0
        %1008 = vmatprep.subr.bf16.mxu0 0
        %1009 = vmatpush1.bf16.msra.mxu0 0
        %1010 = vmatprep.subr.bf16.mxu0 0
        %1011 = vmatpush1.bf16.msra.mxu0 0
        %1012 = vmatprep.subr.bf16.mxu0 0
        %1013 = vmatpush1.bf16.msra.mxu0 0
        %1014 = vmatprep.subr.bf16.mxu0 0
        %1015 = vmatpush1.bf16.msra.mxu0 0
        %1016 = vmatprep.mubr.bf16.mxu0 0
        %1017 = vmatmul.mubr.bf16.gmra.mrb[0].mxu0 %v849
        %v1018 = vpop.f32.mrb[0].mxu0
        %v1019 = vadd.f32 %v821, %v1018
        %v1020 = vpop.f32.mrb[0].mxu0
        %v1021 = vadd.f32 %v821, %v1020
        %v1022 = vpop.f32.mrb[0].mxu0
        %v1023 = vadd.f32 %v826, %v1022
        %v1024 = vpop.f32.mrb[0].mxu0
        %v1025 = vadd.f32 %v826, %v1024
        %1026 = vmatprep.mubr.bf16.mxu0 0
        %1027 = vmatmul.mubr.bf16.gmra.mrb[0].mxu0 %v852
        %v1028 = vpop.f32.mrb[0].mxu0
        %v1029 = vadd.f32 %v831, %v1028
        %v1030 = vpop.f32.mrb[0].mxu0
        %v1031 = vadd.f32 %v831, %v1030
        %v1032 = vpop.f32.mrb[0].mxu0
        %v1033 = vadd.f32 %v836, %v1032
        %v1034 = vpop.f32.mrb[0].mxu0
        %v1035 = vadd.f32 %v836, %v1034
        %1036 = vdwg.mxu0
        %1037 = vmatprep.subr.bf16.mxu0 %v876
        %1038 = vmatpush1.bf16.msra.mxu0 %v873
        %1039 = vmatprep.subr.bf16.mxu0 0
        %1040 = vmatpush1.bf16.msra.mxu0 0
        %1041 = vmatprep.subr.bf16.mxu0 0
        %1042 = vmatpush1.bf16.msra.mxu0 0
        %1043 = vmatprep.subr.bf16.mxu0 0
        %1044 = vmatpush1.bf16.msra.mxu0 0
        %1045 = vmatprep.subr.bf16.mxu0 0
        %1046 = vmatpush1.bf16.msra.mxu0 0
        %1047 = vmatprep.subr.bf16.mxu0 0
        %1048 = vmatpush1.bf16.msra.mxu0 0
        %1049 = vmatprep.subr.bf16.mxu0 0
        %1050 = vmatpush1.bf16.msra.mxu0 0
        %1051 = vmatprep.subr.bf16.mxu0 0
        %1052 = vmatpush1.bf16.msra.mxu0 0
        %1053 = vmatprep.subr.bf16.mxu0 0
        %1054 = vmatpush1.bf16.msra.mxu0 0
        %1055 = vmatprep.subr.bf16.mxu0 0
        %1056 = vmatpush1.bf16.msra.mxu0 0
        %1057 = vmatprep.subr.bf16.mxu0 0
        %1058 = vmatpush1.bf16.msra.mxu0 0
        %1059 = vmatprep.subr.bf16.mxu0 0
        %1060 = vmatpush1.bf16.msra.mxu0 0
        %1061 = vmatprep.subr.bf16.mxu0 0
        %1062 = vmatpush1.bf16.msra.mxu0 0
        %1063 = vmatprep.subr.bf16.mxu0 0
        %1064 = vmatpush1.bf16.msra.mxu0 0
        %1065 = vmatprep.subr.bf16.mxu0 0
        %1066 = vmatpush1.bf16.msra.mxu0 0
        %1067 = vmatprep.subr.bf16.mxu0 0
        %1068 = vmatpush1.bf16.msra.mxu0 0
        %1069 = vmatprep.mubr.bf16.mxu0 0
        %1070 = vmatmul.mubr.bf16.gmra.mrb[0].mxu0 %v849
        %v1071 = vpop.f32.mrb[0].mxu0
        %v1072 = vadd.f32 %v821, %v1071
        %v1073 = vpop.f32.mrb[0].mxu0
        %v1074 = vadd.f32 %v821, %v1073
        %v1075 = vpop.f32.mrb[0].mxu0
        %v1076 = vadd.f32 %v826, %v1075
        %v1077 = vpop.f32.mrb[0].mxu0
        %v1078 = vadd.f32 %v826, %v1077
        %1079 = vmatprep.mubr.bf16.mxu0 0
        %1080 = vmatmul.mubr.bf16.gmra.mrb[0].mxu0 %v852
        %v1081 = vpop.f32.mrb[0].mxu0
        %v1082 = vadd.f32 %v831, %v1081
        %v1083 = vpop.f32.mrb[0].mxu0
        %v1084 = vadd.f32 %v831, %v1083
        %v1085 = vpop.f32.mrb[0].mxu0
        %v1086 = vadd.f32 %v836, %v1085
        %v1087 = vpop.f32.mrb[0].mxu0
        %v1088 = vadd.f32 %v836, %v1087
        %1089 = vdwg.mxu0
        %v1090 = vmax.f32 %v913, 0.0
        %v1091 = vmax.f32 %v915, 0.0
        %v1092 = vmax.f32 %v966, 0.0
        %v1093 = vmax.f32 %v968, 0.0
        %v1094 = vmax.f32 %v1019, 0.0
        %v1095 = vmax.f32 %v1021, 0.0
        %v1096 = vmax.f32 %v1072, 0.0
        %v1097 = vmax.f32 %v1074, 0.0
        %v1098 = vmax.f32 %v917, 0.0
        %v1099 = vmax.f32 %v919, 0.0
        %v1100 = vmax.f32 %v970, 0.0
        %v1101 = vmax.f32 %v972, 0.0
        %v1102 = vmax.f32 %v1023, 0.0
        %v1103 = vmax.f32 %v1025, 0.0
        %v1104 = vmax.f32 %v1076, 0.0
        %v1105 = vmax.f32 %v1078, 0.0
        %v1106 = vmax.f32 %v923, 0.0
        %v1107 = vmax.f32 %v925, 0.0
        %v1108 = vmax.f32 %v976, 0.0
        %v1109 = vmax.f32 %v978, 0.0
        %v1110 = vmax.f32 %v1029, 0.0
        %v1111 = vmax.f32 %v1031, 0.0
        %v1112 = vmax.f32 %v1082, 0.0
        %v1113 = vmax.f32 %v1084, 0.0
        %v1114 = vmax.f32 %v927, 0.0
        %v1115 = vmax.f32 %v929, 0.0
        %v1116 = vmax.f32 %v980, 0.0
        %v1117 = vmax.f32 %v982, 0.0
        %v1118 = vmax.f32 %v1033, 0.0
        %v1119 = vmax.f32 %v1035, 0.0
        %v1120 = vmax.f32 %v1086, 0.0
        %v1121 = vmax.f32 %v1088, 0.0
        %v1122 = vpack.c.bf16 %v1098, %v1090
        %v1123 = vpack.c.bf16 %v1099, %v1091
        %v1124 = vpack.c.bf16 %v1100, %v1092
        %v1125 = vpack.c.bf16 %v1101, %v1093
        %v1126 = vpack.c.bf16 %v1102, %v1094
        %v1127 = vpack.c.bf16 %v1103, %v1095
        %v1128 = vpack.c.bf16 %v1104, %v1096
        %v1129 = vpack.c.bf16 %v1105, %v1097
        %v1130 = vpack.c.bf16 %v1114, %v1106
        %v1131 = vpack.c.bf16 %v1115, %v1107
        %v1132 = vpack.c.bf16 %v1116, %v1108
        %v1133 = vpack.c.bf16 %v1117, %v1109
        %v1134 = vpack.c.bf16 %v1118, %v1110
        %v1135 = vpack.c.bf16 %v1119, %v1111
        %v1136 = vpack.c.bf16 %v1120, %v1112
        %v1137 = vpack.c.bf16 %v1121, %v1113
        %v1138 = vld [vmem:[#allocation7] sm:$0xf]
        %v1139 = vld [vmem:[#allocation7 + $0x4] sm:$0xf]
        %v1140 = vld [vmem:[#allocation7 + $0x8] sm:$0xf]
        %v1141 = vld [vmem:[#allocation7 + $0xc] sm:$0xf]
        %v1142 = vld [vmem:[%s6] sm:$0xff]
        %v1143 = vld [vmem:[%s6 + $0x8] sm:$0xff]
        %v1144 = vld [vmem:[%s6 + $0x10] sm:$0xff]
        %v1145 = vld [vmem:[%s6 + $0x18] sm:$0xff]
        %1147 = vset.pattern.permute.xlu0 0
        %1148 = vperm.xlu0 %1147, %v1142
        %v1149 = vpop.permute.xlu0 %1148
        %1152 = vset.pattern.permute.xlu0 0
        %1153 = vperm.xlu0 %1152, %v1143
        %v1154 = vpop.permute.xlu0 %1153
        %1157 = vset.pattern.permute.xlu0 0
        %1158 = vperm.xlu0 %1157, %v1144
        %v1159 = vpop.permute.xlu0 %1158
        %1162 = vset.pattern.permute.xlu0 0
        %1163 = vperm.xlu0 %1162, %v1145
        %v1164 = vpop.permute.xlu0 %1163
        %v1170 = vunpack.c.l.b16 %v1138
        %v1171 = vunpack.c.l.b16 %v1139
        %v1172 = vunpack.c.l.b16 %v1140
        %v1173 = vunpack.c.l.b16 %v1141
        %v1174 = vpack.c.b16 %v1171, %v1170
        %v1175 = vpack.c.b16 %v1173, %v1172
        %vm1176 = vcmask 261120
        %v1178 = vsel %vm1176, %v1174, 0
        %v1181 = vsel %vm1176, %v1175, 0
        %1183 = vmatprep.subr.bf16.mxu0 %v1123
        %1184 = vmatpush1.bf16.msra.mxu0 %v1122
        %1185 = vmatprep.subr.bf16.mxu0 %v1131
        %1186 = vmatpush1.bf16.msra.mxu0 %v1130
        %1187 = vmatprep.subr.bf16.mxu0 0
        %1188 = vmatpush1.bf16.msra.mxu0 0
        %1189 = vmatprep.subr.bf16.mxu0 0
        %1190 = vmatpush1.bf16.msra.mxu0 0
        %1191 = vmatprep.subr.bf16.mxu0 0
        %1192 = vmatpush1.bf16.msra.mxu0 0
        %1193 = vmatprep.subr.bf16.mxu0 0
        %1194 = vmatpush1.bf16.msra.mxu0 0
        %1195 = vmatprep.subr.bf16.mxu0 0
        %1196 = vmatpush1.bf16.msra.mxu0 0
        %1197 = vmatprep.subr.bf16.mxu0 0
        %1198 = vmatpush1.bf16.msra.mxu0 0
        %1199 = vmatprep.subr.bf16.mxu0 0
        %1200 = vmatpush1.bf16.msra.mxu0 0
        %1201 = vmatprep.subr.bf16.mxu0 0
        %1202 = vmatpush1.bf16.msra.mxu0 0
        %1203 = vmatprep.subr.bf16.mxu0 0
        %1204 = vmatpush1.bf16.msra.mxu0 0
        %1205 = vmatprep.subr.bf16.mxu0 0
        %1206 = vmatpush1.bf16.msra.mxu0 0
        %1207 = vmatprep.subr.bf16.mxu0 0
        %1208 = vmatpush1.bf16.msra.mxu0 0
        %1209 = vmatprep.subr.bf16.mxu0 0
        %1210 = vmatpush1.bf16.msra.mxu0 0
        %1211 = vmatprep.subr.bf16.mxu0 0
        %1212 = vmatpush1.bf16.msra.mxu0 0
        %1213 = vmatprep.subr.bf16.mxu0 0
        %1214 = vmatpush1.bf16.msra.mxu0 0
        %1215 = vmatprep.mubr.bf16.mxu0 0
        %1216 = vmatmul.mubr.bf16.gmra.mrb[0].mxu0 %v1178
        %v1217 = vpop.f32.mrb[0].mxu0
        %v1218 = vadd.f32 %v1149, %v1217
        %v1219 = vpop.f32.mrb[0].mxu0
        %v1220 = vadd.f32 %v1149, %v1219
        %v1221 = vpop.f32.mrb[0].mxu0
        %v1222 = vadd.f32 %v1154, %v1221
        %v1223 = vpop.f32.mrb[0].mxu0
        %v1224 = vadd.f32 %v1154, %v1223
        %1225 = vmatprep.mubr.bf16.mxu0 0
        %1226 = vmatmul.mubr.bf16.gmra.mrb[0].mxu0 %v1181
        %v1227 = vpop.f32.mrb[0].mxu0
        %v1228 = vadd.f32 %v1159, %v1227
        %v1229 = vpop.f32.mrb[0].mxu0
        %v1230 = vadd.f32 %v1159, %v1229
        %v1231 = vpop.f32.mrb[0].mxu0
        %v1232 = vadd.f32 %v1164, %v1231
        %v1233 = vpop.f32.mrb[0].mxu0
        %v1234 = vadd.f32 %v1164, %v1233
        %1235 = vdwg.mxu0
        %1236 = vmatprep.subr.bf16.mxu0 %v1125
        %1237 = vmatpush1.bf16.msra.mxu0 %v1124
        %1238 = vmatprep.subr.bf16.mxu0 %v1133
        %1239 = vmatpush1.bf16.msra.mxu0 %v1132
        %1240 = vmatprep.subr.bf16.mxu0 0
        %1241 = vmatpush1.bf16.msra.mxu0 0
        %1242 = vmatprep.subr.bf16.mxu0 0
        %1243 = vmatpush1.bf16.msra.mxu0 0
        %1244 = vmatprep.subr.bf16.mxu0 0
        %1245 = vmatpush1.bf16.msra.mxu0 0
        %1246 = vmatprep.subr.bf16.mxu0 0
        %1247 = vmatpush1.bf16.msra.mxu0 0
        %1248 = vmatprep.subr.bf16.mxu0 0
        %1249 = vmatpush1.bf16.msra.mxu0 0
        %1250 = vmatprep.subr.bf16.mxu0 0
        %1251 = vmatpush1.bf16.msra.mxu0 0
        %1252 = vmatprep.subr.bf16.mxu0 0
        %1253 = vmatpush1.bf16.msra.mxu0 0
        %1254 = vmatprep.subr.bf16.mxu0 0
        %1255 = vmatpush1.bf16.msra.mxu0 0
        %1256 = vmatprep.subr.bf16.mxu0 0
        %1257 = vmatpush1.bf16.msra.mxu0 0
        %1258 = vmatprep.subr.bf16.mxu0 0
        %1259 = vmatpush1.bf16.msra.mxu0 0
        %1260 = vmatprep.subr.bf16.mxu0 0
        %1261 = vmatpush1.bf16.msra.mxu0 0
        %1262 = vmatprep.subr.bf16.mxu0 0
        %1263 = vmatpush1.bf16.msra.mxu0 0
        %1264 = vmatprep.subr.bf16.mxu0 0
        %1265 = vmatpush1.bf16.msra.mxu0 0
        %1266 = vmatprep.subr.bf16.mxu0 0
        %1267 = vmatpush1.bf16.msra.mxu0 0
        %1268 = vmatprep.mubr.bf16.mxu0 0
        %1269 = vmatmul.mubr.bf16.gmra.mrb[0].mxu0 %v1178
        %v1270 = vpop.f32.mrb[0].mxu0
        %v1271 = vadd.f32 %v1149, %v1270
        %v1272 = vpop.f32.mrb[0].mxu0
        %v1273 = vadd.f32 %v1149, %v1272
        %v1274 = vpop.f32.mrb[0].mxu0
        %v1275 = vadd.f32 %v1154, %v1274
        %v1276 = vpop.f32.mrb[0].mxu0
        %v1277 = vadd.f32 %v1154, %v1276
        %1278 = vmatprep.mubr.bf16.mxu0 0
        %1279 = vmatmul.mubr.bf16.gmra.mrb[0].mxu0 %v1181
        %v1280 = vpop.f32.mrb[0].mxu0
        %v1281 = vadd.f32 %v1159, %v1280
        %v1282 = vpop.f32.mrb[0].mxu0
        %v1283 = vadd.f32 %v1159, %v1282
        %v1284 = vpop.f32.mrb[0].mxu0
        %v1285 = vadd.f32 %v1164, %v1284
        %v1286 = vpop.f32.mrb[0].mxu0
        %v1287 = vadd.f32 %v1164, %v1286
        %1288 = vdwg.mxu0
        %1289 = vmatprep.subr.bf16.mxu0 %v1127
        %1290 = vmatpush1.bf16.msra.mxu0 %v1126
        %1291 = vmatprep.subr.bf16.mxu0 %v1135
        %1292 = vmatpush1.bf16.msra.mxu0 %v1134
        %1293 = vmatprep.subr.bf16.mxu0 0
        %1294 = vmatpush1.bf16.msra.mxu0 0
        %1295 = vmatprep.subr.bf16.mxu0 0
        %1296 = vmatpush1.bf16.msra.mxu0 0
        %1297 = vmatprep.subr.bf16.mxu0 0
        %1298 = vmatpush1.bf16.msra.mxu0 0
        %1299 = vmatprep.subr.bf16.mxu0 0
        %1300 = vmatpush1.bf16.msra.mxu0 0
        %1301 = vmatprep.subr.bf16.mxu0 0
        %1302 = vmatpush1.bf16.msra.mxu0 0
        %1303 = vmatprep.subr.bf16.mxu0 0
        %1304 = vmatpush1.bf16.msra.mxu0 0
        %1305 = vmatprep.subr.bf16.mxu0 0
        %1306 = vmatpush1.bf16.msra.mxu0 0
        %1307 = vmatprep.subr.bf16.mxu0 0
        %1308 = vmatpush1.bf16.msra.mxu0 0
        %1309 = vmatprep.subr.bf16.mxu0 0
        %1310 = vmatpush1.bf16.msra.mxu0 0
        %1311 = vmatprep.subr.bf16.mxu0 0
        %1312 = vmatpush1.bf16.msra.mxu0 0
        %1313 = vmatprep.subr.bf16.mxu0 0
        %1314 = vmatpush1.bf16.msra.mxu0 0
        %1315 = vmatprep.subr.bf16.mxu0 0
        %1316 = vmatpush1.bf16.msra.mxu0 0
        %1317 = vmatprep.subr.bf16.mxu0 0
        %1318 = vmatpush1.bf16.msra.mxu0 0
        %1319 = vmatprep.subr.bf16.mxu0 0
        %1320 = vmatpush1.bf16.msra.mxu0 0
        %1321 = vmatprep.mubr.bf16.mxu0 0
        %1322 = vmatmul.mubr.bf16.gmra.mrb[0].mxu0 %v1178
        %v1323 = vpop.f32.mrb[0].mxu0
        %v1324 = vadd.f32 %v1149, %v1323
        %v1325 = vpop.f32.mrb[0].mxu0
        %v1326 = vadd.f32 %v1149, %v1325
        %v1327 = vpop.f32.mrb[0].mxu0
        %v1328 = vadd.f32 %v1154, %v1327
        %v1329 = vpop.f32.mrb[0].mxu0
        %v1330 = vadd.f32 %v1154, %v1329
        %1331 = vmatprep.mubr.bf16.mxu0 0
        %1332 = vmatmul.mubr.bf16.gmra.mrb[0].mxu0 %v1181
        %v1333 = vpop.f32.mrb[0].mxu0
        %v1334 = vadd.f32 %v1159, %v1333
        %v1335 = vpop.f32.mrb[0].mxu0
        %v1336 = vadd.f32 %v1159, %v1335
        %v1337 = vpop.f32.mrb[0].mxu0
        %v1338 = vadd.f32 %v1164, %v1337
        %v1339 = vpop.f32.mrb[0].mxu0
        %v1340 = vadd.f32 %v1164, %v1339
        %1341 = vdwg.mxu0
        %1342 = vmatprep.subr.bf16.mxu0 %v1129
        %1343 = vmatpush1.bf16.msra.mxu0 %v1128
        %1344 = vmatprep.subr.bf16.mxu0 %v1137
        %1345 = vmatpush1.bf16.msra.mxu0 %v1136
        %1346 = vmatprep.subr.bf16.mxu0 0
        %1347 = vmatpush1.bf16.msra.mxu0 0
        %1348 = vmatprep.subr.bf16.mxu0 0
        %1349 = vmatpush1.bf16.msra.mxu0 0
        %1350 = vmatprep.subr.bf16.mxu0 0
        %1351 = vmatpush1.bf16.msra.mxu0 0
        %1352 = vmatprep.subr.bf16.mxu0 0
        %1353 = vmatpush1.bf16.msra.mxu0 0
        %1354 = vmatprep.subr.bf16.mxu0 0
        %1355 = vmatpush1.bf16.msra.mxu0 0
        %1356 = vmatprep.subr.bf16.mxu0 0
        %1357 = vmatpush1.bf16.msra.mxu0 0
        %1358 = vmatprep.subr.bf16.mxu0 0
        %1359 = vmatpush1.bf16.msra.mxu0 0
        %1360 = vmatprep.subr.bf16.mxu0 0
        %1361 = vmatpush1.bf16.msra.mxu0 0
        %1362 = vmatprep.subr.bf16.mxu0 0
        %1363 = vmatpush1.bf16.msra.mxu0 0
        %1364 = vmatprep.subr.bf16.mxu0 0
        %1365 = vmatpush1.bf16.msra.mxu0 0
        %1366 = vmatprep.subr.bf16.mxu0 0
        %1367 = vmatpush1.bf16.msra.mxu0 0
        %1368 = vmatprep.subr.bf16.mxu0 0
        %1369 = vmatpush1.bf16.msra.mxu0 0
        %1370 = vmatprep.subr.bf16.mxu0 0
        %1371 = vmatpush1.bf16.msra.mxu0 0
        %1372 = vmatprep.subr.bf16.mxu0 0
        %1373 = vmatpush1.bf16.msra.mxu0 0
        %1374 = vmatprep.mubr.bf16.mxu0 0
        %1375 = vmatmul.mubr.bf16.gmra.mrb[0].mxu0 %v1178
        %v1376 = vpop.f32.mrb[0].mxu0
        %v1377 = vadd.f32 %v1149, %v1376
        %v1378 = vpop.f32.mrb[0].mxu0
        %v1379 = vadd.f32 %v1149, %v1378
        %v1380 = vpop.f32.mrb[0].mxu0
        %v1381 = vadd.f32 %v1154, %v1380
        %v1382 = vpop.f32.mrb[0].mxu0
        %v1383 = vadd.f32 %v1154, %v1382
        %1384 = vmatprep.mubr.bf16.mxu0 0
        %1385 = vmatmul.mubr.bf16.gmra.mrb[0].mxu0 %v1181
        %v1386 = vpop.f32.mrb[0].mxu0
        %v1387 = vadd.f32 %v1159, %v1386
        %v1388 = vpop.f32.mrb[0].mxu0
        %v1389 = vadd.f32 %v1159, %v1388
        %v1390 = vpop.f32.mrb[0].mxu0
        %v1391 = vadd.f32 %v1164, %v1390
        %v1392 = vpop.f32.mrb[0].mxu0
        %v1393 = vadd.f32 %v1164, %v1392
        %1394 = vdwg.mxu0
        %v1395 = vmax.f32 %v1218, 0.0
        %v1396 = vmax.f32 %v1220, 0.0
        %v1397 = vmax.f32 %v1271, 0.0
        %v1398 = vmax.f32 %v1273, 0.0
        %v1399 = vmax.f32 %v1324, 0.0
        %v1400 = vmax.f32 %v1326, 0.0
        %v1401 = vmax.f32 %v1377, 0.0
        %v1402 = vmax.f32 %v1379, 0.0
        %v1403 = vmax.f32 %v1222, 0.0
        %v1404 = vmax.f32 %v1224, 0.0
        %v1405 = vmax.f32 %v1275, 0.0
        %v1406 = vmax.f32 %v1277, 0.0
        %v1407 = vmax.f32 %v1328, 0.0
        %v1408 = vmax.f32 %v1330, 0.0
        %v1409 = vmax.f32 %v1381, 0.0
        %v1410 = vmax.f32 %v1383, 0.0
        %v1411 = vmax.f32 %v1228, 0.0
        %v1412 = vmax.f32 %v1230, 0.0
        %v1413 = vmax.f32 %v1281, 0.0
        %v1414 = vmax.f32 %v1283, 0.0
        %v1415 = vmax.f32 %v1334, 0.0
        %v1416 = vmax.f32 %v1336, 0.0
        %v1417 = vmax.f32 %v1387, 0.0
        %v1418 = vmax.f32 %v1389, 0.0
        %v1419 = vmax.f32 %v1232, 0.0
        %v1420 = vmax.f32 %v1234, 0.0
        %v1421 = vmax.f32 %v1285, 0.0
        %v1422 = vmax.f32 %v1287, 0.0
        %v1423 = vmax.f32 %v1338, 0.0
        %v1424 = vmax.f32 %v1340, 0.0
        %v1425 = vmax.f32 %v1391, 0.0
        %v1426 = vmax.f32 %v1393, 0.0
        %v1427 = vadd.f32 %v1395, %v1396
        %v1428 = vadd.f32 %v1427, %v1397
        %v1429 = vadd.f32 %v1428, %v1398
        %v1430 = vadd.f32 %v1429, %v1399
        %v1431 = vadd.f32 %v1430, %v1400
        %v1432 = vadd.f32 %v1431, %v1401
        %v1433 = vadd.f32 %v1432, %v1402
        %1434 = vadd.xlane.f32.xlu0 %v1433
        %v1435 = vpop.xlane.xlu0 %1434
        %v1436 = vadd.f32 %v1403, %v1404
        %v1437 = vadd.f32 %v1436, %v1405
        %v1438 = vadd.f32 %v1437, %v1406
        %v1439 = vadd.f32 %v1438, %v1407
        %v1440 = vadd.f32 %v1439, %v1408
        %v1441 = vadd.f32 %v1440, %v1409
        %v1442 = vadd.f32 %v1441, %v1410
        %1443 = vadd.xlane.f32.xlu0 %v1442
        %v1444 = vpop.xlane.xlu0 %1443
        %v1445 = vadd.f32 %v1411, %v1412
        %v1446 = vadd.f32 %v1445, %v1413
        %v1447 = vadd.f32 %v1446, %v1414
        %v1448 = vadd.f32 %v1447, %v1415
        %v1449 = vadd.f32 %v1448, %v1416
        %v1450 = vadd.f32 %v1449, %v1417
        %v1451 = vadd.f32 %v1450, %v1418
        %1452 = vadd.xlane.f32.xlu0 %v1451
        %v1453 = vpop.xlane.xlu0 %1452
        %v1454 = vadd.f32 %v1419, %v1420
        %v1455 = vadd.f32 %v1454, %v1421
        %v1456 = vadd.f32 %v1455, %v1422
        %v1457 = vadd.f32 %v1456, %v1423
        %v1458 = vadd.f32 %v1457, %v1424
        %v1459 = vadd.f32 %v1458, %v1425
        %v1460 = vadd.f32 %v1459, %v1426
        %1461 = vadd.xlane.f32.xlu0 %v1460
        %v1462 = vpop.xlane.xlu0 %1461
        %v1463 = vrcp.pop 1024.0
        %v1464 = vmul.f32 %v1435, %v1463
        %v1465 = vmul.f32 %v1444, %v1463
        %v1466 = vmul.f32 %v1453, %v1463
        %v1467 = vmul.f32 %v1462, %v1463
        %v1468 = vld [vmem:[%s7] sm:$0xff]
        %v1469 = vld [vmem:[%s7 + $0x8] sm:$0xff]
        %v1470 = vld [vmem:[%s7 + $0x10] sm:$0xff]
        %v1471 = vld [vmem:[%s7 + $0x18] sm:$0xff]
        %v1472 = vld [vmem:[%s8] sm:$0x1]
        %1473 = vxpose.xlu0.b32.start [1/16] %v1464, 128
        %1474 = vxpose.xlu0.b32.cont [2/16] %v1465, 128
        %1475 = vxpose.xlu0.b32.cont [3/16] %v1466, 128
        %1476 = vxpose.xlu0.b32.cont [4/16] %v1467, 128
        %1477 = vxpose.xlu0.b32.cont [5/16] 0.0, 128
        %1478 = vxpose.xlu0.b32.cont [6/16] 0.0, 128
        %1479 = vxpose.xlu0.b32.cont [7/16] 0.0, 128
        %1480 = vxpose.xlu0.b32.cont [8/16] 0.0, 128
        %1481 = vxpose.xlu0.b32.cont [9/16] 0.0, 128
        %1482 = vxpose.xlu0.b32.cont [10/16] 0.0, 128
        %1483 = vxpose.xlu0.b32.cont [11/16] 0.0, 128
        %1484 = vxpose.xlu0.b32.cont [12/16] 0.0, 128
        %1485 = vxpose.xlu0.b32.cont [13/16] 0.0, 128
        %1486 = vxpose.xlu0.b32.cont [14/16] 0.0, 128
        %1487 = vxpose.xlu0.b32.cont [15/16] 0.0, 128
        %1488 = vxpose.xlu0.b32.end [16/16] 0.0, 128
        %v1489 = vpop.trf.xlu0
        %v1490 = vpop.trf.xlu0
        %v1491 = vpop.trf.xlu0
        %v1492 = vpop.trf.xlu0
        %v1493 = vpop.trf.xlu0
        %v1494 = vpop.trf.xlu0
        %v1495 = vpop.trf.xlu0
        %v1496 = vpop.trf.xlu0
        %v1497 = vpop.trf.xlu0
        %v1498 = vpop.trf.xlu0
        %v1499 = vpop.trf.xlu0
        %v1500 = vpop.trf.xlu0
        %v1501 = vpop.trf.xlu0
        %v1502 = vpop.trf.xlu0
        %v1503 = vpop.trf.xlu0
        %v1504 = vpop.trf.xlu0
        %v1506 = vsel %vm1176, %v1489, 0
        %1508 = vmatprep.subr.mxu0 0.0
        %1509 = vmatpush1.msra.mxu0 %v1468
        %1510 = vmatprep.subr.mxu0 0.0
        %1511 = vmatpush1.msra.mxu0 %v1469
        %1512 = vmatprep.subr.mxu0 0.0
        %1513 = vmatpush1.msra.mxu0 %v1470
        %1514 = vmatprep.subr.mxu0 0.0
        %1515 = vmatpush1.msra.mxu0 %v1471
        %1516 = vmatprep.subr.mxu0 0.0
        %1517 = vmatpush1.msra.mxu0 0.0
        %1518 = vmatprep.subr.mxu0 0.0
        %1519 = vmatpush1.msra.mxu0 0.0
        %1520 = vmatprep.subr.mxu0 0.0
        %1521 = vmatpush1.msra.mxu0 0.0
        %1522 = vmatprep.subr.mxu0 0.0
        %1523 = vmatpush1.msra.mxu0 0.0
        %1524 = vmatprep.subr.mxu0 0.0
        %1525 = vmatpush1.msra.mxu0 0.0
        %1526 = vmatprep.subr.mxu0 0.0
        %1527 = vmatpush1.msra.mxu0 0.0
        %1528 = vmatprep.subr.mxu0 0.0
        %1529 = vmatpush1.msra.mxu0 0.0
        %1530 = vmatprep.subr.mxu0 0.0
        %1531 = vmatpush1.msra.mxu0 0.0
        %1532 = vmatprep.subr.mxu0 0.0
        %1533 = vmatpush1.msra.mxu0 0.0
        %1534 = vmatprep.subr.mxu0 0.0
        %1535 = vmatpush1.msra.mxu0 0.0
        %1536 = vmatprep.subr.mxu0 0.0
        %1537 = vmatpush1.msra.mxu0 0.0
        %1538 = vmatprep.subr.mxu0 0.0
        %1539 = vmatpush1.msra.mxu0 0.0
        %1540 = vmatprep.subr.mxu0 0.0
        %1541 = vmatpush1.msra.mxu0 0.0
        %1542 = vmatprep.subr.mxu0 0.0
        %1543 = vmatpush1.msra.mxu0 0.0
        %1544 = vmatprep.subr.mxu0 0.0
        %1545 = vmatpush1.msra.mxu0 0.0
        %1546 = vmatprep.subr.mxu0 0.0
        %1547 = vmatpush1.msra.mxu0 0.0
        %1548 = vmatprep.subr.mxu0 0.0
        %1549 = vmatpush1.msra.mxu0 0.0
        %1550 = vmatprep.subr.mxu0 0.0
        %1551 = vmatpush1.msra.mxu0 0.0
        %1552 = vmatprep.subr.mxu0 0.0
        %1553 = vmatpush1.msra.mxu0 0.0
        %1554 = vmatprep.subr.mxu0 0.0
        %1555 = vmatpush1.msra.mxu0 0.0
        %1556 = vmatprep.subr.mxu0 0.0
        %1557 = vmatpush1.msra.mxu0 0.0
        %1558 = vmatprep.subr.mxu0 0.0
        %1559 = vmatpush1.msra.mxu0 0.0
        %1560 = vmatprep.subr.mxu0 0.0
        %1561 = vmatpush1.msra.mxu0 0.0
        %1562 = vmatprep.subr.mxu0 0.0
        %1563 = vmatpush1.msra.mxu0 0.0
        %1564 = vmatprep.subr.mxu0 0.0
        %1565 = vmatpush1.msra.mxu0 0.0
        %1566 = vmatprep.subr.mxu0 0.0
        %1567 = vmatpush1.msra.mxu0 0.0
        %1568 = vmatprep.subr.mxu0 0.0
        %1569 = vmatpush1.msra.mxu0 0.0
        %1570 = vmatprep.subr.mxu0 0.0
        %1571 = vmatpush1.msra.mxu0 0.0
        %1572 = vmatprep.mubr.f32.mxu0 0.0
        %1573 = vmatmul.mubr.f32.gmra.mrb[0].mxu0 %v1506
        %v1574 = vpop.f32.mrb[0].mxu0
        %v1575 = vadd.f32 %v1472, %v1574
        %v1576 = vpop.f32.mrb[0].mxu0
        %1577 = vdwg.mxu0
        %vm1578 = vcmask 1040384
        %v1579 = vsel %vm1578, %v1575, -inf
        %1580 = vmax.xlane.f32.xlu0 %v1579
        %v1581 = vpop.xlane.xlu0 %1580
        %v1582 = vsub.f32 %v1575, %v1581
        %v1583 = vmul.f32 %v1582, 1.442695
        %v1584 = vpow.pop %v1583
        %v1585 = vsel %vm1578, %v1584, 0.0
        %1586 = vadd.xlane.f32.xlu0 %v1585
        %v1587 = vpop.xlane.xlu0 %1586
        %v1588 = vrcp.pop %v1587
        %v1589 = vmul.f32 %v1584, %v1588
        %1590 = vst [vmem:[%s373] sm:$0x1] %v1589
        %s1591 = sand.u32 %s229, 1
        %s1592 = scalar_lea.sflag [#allocation4], %s1591
        %s1593 = sand.u32 %s229, 1
        %s1594 = scalar_lea.vmem [#allocation8], %s1593
        // Predicated region
        $region69: #{tpu_custom_call.1} parent=55 // pred_check
          %p1595 = pneg %p239
        $region70: #{tpu_custom_call.1} parent=55 // pred_check_branch
          %1597 = sbr.rel (%p1595) target = $region72
        $region71: #{tpu_custom_call.1} parent=55 // pred_region
          %s1599 = ssub.s32 16, 16
          %1600 = vsyncadd %s1592, %s1599
          %s1601 = smul.addr %s27, 16
          %s1602 = scalar_lea.hbm %s9, %s1601
          %s1604 = sshll.u32 %s1594, 4
          %s1605 = int_to_ptr.vmem [resolvable:$true] %s1604
          %1607 = dma.vmem_to_hbm [thread:$0]  %s1605, 16, %s1602, %s1592
        $region72: #{tpu_custom_call.1} parent=55 // pred_fallthru
          _
      $region56: #{tpu_custom_call.1} parent=5 // pred_fallthru
        _
      %p1608 = scmp.le.s32.totalorder 2, %s22
      // Predicated region
      $region73: #{tpu_custom_call.1} parent=5 // pred_check
        %p1609 = pneg %p1608
      $region74: #{tpu_custom_call.1} parent=5 // pred_check_branch
        %1611 = sbr.rel (%p1609) target = $region76
      $region75: #{tpu_custom_call.1} parent=5 // pred_region
        %s1612 = ssub.s32 %s22, 2
        // Predicated region
        $region77: #{tpu_custom_call.1} parent=75 // pred_check
          %p1613 = pneg %p245
        $region78: #{tpu_custom_call.1} parent=75 // pred_check_branch
          %1615 = sbr.rel (%p1613) target = $region80
        $region79: #{tpu_custom_call.1} parent=75 // pred_region
          %s1616 = sand.u32 %s230, 1
          %s1617 = scalar_lea.sflag [#allocation4], %s1616
          %s1618 = sand.u32 %s230, 1
          %s1619 = scalar_lea.vmem [#allocation8], %s1618
          %1620 = dma.done %s1617, 16
        $region80: #{tpu_custom_call.1} parent=75 // pred_fallthru
          _
      $region76: #{tpu_custom_call.1} parent=5 // pred_fallthru
        _
    $region6: #{tpu_custom_call.1} parent=1 // loop_footer
      %s26 = sadd.s32 1, %s22
    $region7: #{tpu_custom_call.1} parent=1 // loop_footer_branch
      %21 = sbr.rel target = $region3
    $region8: #{tpu_custom_call.1} parent=1 // loop_exit
      _
    %1621 = vsyncpa [#allocation3], 1
    %s1622 = scalar_lea.sflag [#allocation3], 1
    %1623 = vsyncpa %s1622, 1
    %1624 = vsyncpa [#allocation6], 1
    %1625 = vsyncpa [#allocation4], 1
    %s1626 = scalar_lea.sflag [#allocation4], 1
    %1627 = vsyncpa %s1626, 1

</llo_original>
